<compile_context>
chip_gen: v6e
topology: v6e:2x2x1
jax: 0.10.0
libtpu: 0.0.40
codegen_flags: <defaults>
</compile_context>

<pallas_src>
import functools

import jax
import jax.numpy as jnp
from jax import lax
from jax.experimental import pallas as pl
from jax.experimental.pallas import tpu as pltpu


def _round_up(x, m):
    return ((x + m - 1) // m) * m


def _bottleneck_kernel(L_real, mask_rows,
                       x_ref, xh_ref, w1_ref, b1_ref, w2_ref, b2_ref,
                       w3_ref, b3_ref, o_ref):
    j = pl.program_id(1)
    TL = x_ref.shape[1]

    xb = x_ref[0]                                    # (TL, Cp) bf16
    xh = xh_ref[0, 0]                                # (8, Cp) bf16; rows 0/1 = prev/next halo

    # conv1 (1x1, BN1 scale folded) + bias + relu.  The halo rows are stacked onto
    # the tile so one MXU matmul covers tile + halos.
    x_all = jnp.concatenate([xb, xh], axis=0)        # (TL + 8, Cp) bf16
    h = jnp.dot(x_all, w1_ref[...], preferred_element_type=jnp.float32) + b1_ref[...]
    h = jnp.maximum(h, 0.0)                          # (TL + 8, Wp) f32

    if mask_rows:  # traced only when L % TL != 0: zero conv1 rows past the true end
        r = lax.broadcasted_iota(jnp.int32, (h.shape[0], 1), 0)
        valid = jnp.logical_or(r >= TL, j * TL + r < L_real)
        h = h * valid.astype(h.dtype)

    # halo validity (zero-padding semantics of conv3x1 at the sequence edges)
    prev_gate = (j > 0).astype(jnp.float32)
    next_gate = ((j + 1) * TL < L_real).astype(jnp.float32)

    hb = h[:TL].astype(jnp.bfloat16)                                 # (TL, Wp)
    hprev_row = (h[TL:TL + 1] * prev_gate).astype(jnp.bfloat16)      # conv1(x[j*TL-1])
    hnext_row = (h[TL + 1:TL + 2] * next_gate).astype(jnp.bfloat16)  # conv1(x[(j+1)*TL])

    h_prev = jnp.concatenate([hprev_row, hb[:TL - 1]], axis=0)
    h_next = jnp.concatenate([hb[1:], hnext_row], axis=0)
    x2 = jnp.concatenate([h_prev, hb, h_next], axis=1)               # (TL, 3*Wp) bf16

    # conv2 (3x1) fused into a single K=3W matmul (BN2 scale folded) + bias + relu
    h2 = jnp.maximum(
        jnp.dot(x2, w2_ref[...], preferred_element_type=jnp.float32) + b2_ref[...],
        0.0).astype(jnp.bfloat16)                                    # (TL, Wp)

    # conv3 (1x1, BN3 scale folded) + bias + residual add + relu
    h3 = jnp.dot(h2, w3_ref[...], preferred_element_type=jnp.float32) + b3_ref[...]
    o_ref[0] = jnp.maximum(h3 + xb.astype(jnp.float32), 0.0).astype(o_ref.dtype)


def _fold_bn(w_in_out, bn, eps=1e-5):
    gamma, beta, mean, var = bn
    s = gamma / jnp.sqrt(var + eps)
    return w_in_out * s[None, :], (beta - mean * s)


def _vmem_capacity_bytes():
    try:
        info = pltpu.get_tpu_info()
        cap = getattr(info, "vmem_capacity_bytes", None)
        if cap:
            return int(cap)
    except Exception:
        pass
    return 64 * 1024 * 1024      # conservative (v7x-sized) default


def bottleneck_forward_nlc(x_nlc, params, *, tile_l=1024, lane=128):
    """Channels-last core: (N, L, Cin) -> (N, L, Cout) bfloat16.

    When stacking bottleneck blocks, keep activations in this NLC/bf16 layout so
    the NCL<->NLC transposes and f32 casts happen only once at the ends.
    """
    N, L, Cin = x_nlc.shape

    w1_t = jnp.transpose(params["w1"][:, :, 0], (1, 0))       # (Cin, W)
    W = w1_t.shape[1]
    w3_t = jnp.transpose(params["w3"][:, :, 0], (1, 0))       # (W, Cout)
    Cout = w3_t.shape[1]
    assert Cin == Cout, "identity residual requires inplanes == planes * expansion"

    # ---- fold BN (inference) scales into weights; keep biases in f32 ------------
    w1f, b1 = _fold_bn(w1_t, params["bn1"])
    w2 = params["w2"]                                          # (W, W, 3) = (out, in, k)
    g2, be2, m2, v2 = params["bn2"]
    s2 = g2 / jnp.sqrt(v2 + 1e-5)
    b2 = be2 - m2 * s2
    w2m = jnp.transpose(w2[:, :, 0], (1, 0)) * s2[None, :]     # tap for in[l-1]
    w20 = jnp.transpose(w2[:, :, 1], (1, 0)) * s2[None, :]     # tap for in[l]
    w2p = jnp.transpose(w2[:, :, 2], (1, 0)) * s2[None, :]     # tap for in[l+1]
    w3f, b3 = _fold_bn(w3_t, params["bn3"])

    # ---- lane-pad channels; derive the L tile from the chip's VMEM capacity -----
    Cp = _round_up(max(Cin, 1), lane)
    Wp = _round_up(max(W, 1), lane)

    vmem_cap = _vmem_capacity_bytes()
    weight_bytes = 2 * (Cp * Wp + 3 * Wp * Wp + Wp * Cp) + 4 * (2 * Wp + Cp)
    # per-row footprint: bf16 x/out tiles (double-buffered) + in-kernel staging
    per_row = 8 * Cp + 18 * Wp + 6 * Cp
    budget = max(int(0.55 * vmem_cap) - weight_bytes, 1 << 20)
    tl_cap = max(128, (budget // per_row) // 8 * 8)
    TL = min(tile_l, tl_cap)
    if L <= TL:
        TL = _round_up(L, 8)
    Lp = _round_up(L, TL)
    nt = Lp // TL
    if N * nt < 2 and L > 8:                 # keep both v7x TensorCores busy
        TL = _round_up((L + 1) // 2, 8)
        Lp = _round_up(L, TL)
        nt = Lp // TL

    def padw(w, rows, cols):
        return jnp.pad(w, ((0, rows - w.shape[0]), (0, cols - w.shape[1])))

    w1p = padw(w1f, Cp, Wp).astype(jnp.bfloat16)                         # (Cp, Wp)
    w2cat = jnp.concatenate(
        [padw(w2m, Wp, Wp), padw(w20, Wp, Wp), padw(w2p, Wp, Wp)],
        axis=0).astype(jnp.bfloat16)                                     # (3Wp, Wp)
    w3p = padw(w3f, Wp, Cp).astype(jnp.bfloat16)                         # (Wp, Cp)
    b1p = jnp.pad(b1, (0, Wp - W)).reshape(1, Wp).astype(jnp.float32)
    b2p = jnp.pad(b2, (0, Wp - W)).reshape(1, Wp).astype(jnp.float32)
    b3p = jnp.pad(b3, (0, Cp - Cout)).reshape(1, Cp).astype(jnp.float32)

    # bf16 channels-last padded activation (halves HBM traffic vs f32 I/O)
    xb = x_nlc.astype(jnp.bfloat16)
    xb = jnp.pad(xb, ((0, 0), (0, Lp - L), (0, Cp - Cin)))               # (N, Lp, Cp)

    # halo rows per tile: x[j*TL-1] and x[(j+1)*TL], gathered with strided slices
    # (no full-array pad).  Edge rows may hold garbage; the in-kernel prev/next
    # gates zero them, reproducing conv3x1's zero padding.
    prev_rows = jnp.concatenate([xb[:, :1, :], xb[:, TL - 1:Lp - 1:TL, :]], axis=1)
    next_rows = jnp.concatenate([xb[:, TL:Lp:TL, :], xb[:, :1, :]], axis=1)
    x_halo = jnp.concatenate(
        [prev_rows[:, :, None, :], next_rows[:, :, None, :],
         jnp.zeros((N, nt, 6, Cp), jnp.bfloat16)], axis=2)               # (N, nt, 8, Cp)

    kernel = functools.partial(_bottleneck_kernel, L, Lp != L)

    flops = 2 * N * L * (Cin * W + 3 * W * W + W * Cout)
    bytes_accessed = 2 * N * Lp * Cp * 2 + N * nt * 8 * Cp * 2 + 2 * (
        w1p.size + w2cat.size + w3p.size)
    cost = pl.CostEstimate(flops=flops, transcendentals=0,
                           bytes_accessed=int(bytes_accessed))

    vmem_limit = int(min(max(vmem_cap - (16 << 20), 32 << 20), 96 << 20))

    def run(single_buffer_weights):
        def wspec(shape):
            idx = lambda n, j, _s=len(shape): (0,) * _s
            if single_buffer_weights:
                # constant index_map -> no need to double-buffer these
                return pl.BlockSpec(shape, idx, pipeline_mode=pl.Buffered(1))
            return pl.BlockSpec(shape, idx)

        return pl.pallas_call(
            kernel,
            out_shape=jax.ShapeDtypeStruct((N, Lp, Cp), jnp.bfloat16),
            grid=(N, nt),
            in_specs=[
                pl.BlockSpec((1, TL, Cp), lambda n, j: (n, j, 0)),       # x tile
                pl.BlockSpec((1, 1, 8, Cp), lambda n, j: (n, j, 0, 0)),  # halo rows
                wspec((Cp, Wp)), wspec((1, Wp)),                         # w1, b1
                wspec((3 * Wp, Wp)), wspec((1, Wp)),                     # w2cat, b2
                wspec((Wp, Cp)), wspec((1, Cp)),                         # w3, b3
            ],
            out_specs=pl.BlockSpec((1, TL, Cp), lambda n, j: (n, j, 0)),
            compiler_params=pltpu.CompilerParams(
                dimension_semantics=("parallel", "parallel"),
                vmem_limit_bytes=vmem_limit),
            cost_estimate=cost,
        )(xb, x_halo, w1p, b1p, w2cat, b2p, w3p, b3p)

    try:
        out_nlc = run(True)
    except Exception:   # fall back to default (double) buffering of the weights
        out_nlc = run(False)

    return out_nlc[:, :L, :Cout]


def bottleneck_forward(x_ncl, params, *, tile_l=1024):
    """PyTorch-layout entry point: (N, Cin, L) f32 -> (N, Cout, L) f32.

    The NCL<->NLC transposes + f32 cast at this boundary are full HBM round
    trips; for stacked blocks call `bottleneck_forward_nlc` and stay NLC/bf16.
    """
    x_nlc = jnp.transpose(x_ncl, (0, 2, 1))
    out_nlc = bottleneck_forward_nlc(x_nlc, params, tile_l=tile_l)
    return jnp.transpose(out_nlc, (0, 2, 1)).astype(x_ncl.dtype)


def bottleneck_reference(x_ncl, params):
    """Pure-JAX (f32) reference using lax convolutions, for verification."""
    dn = ("NCH", "OIH", "NCH")

    def bn(y, p):
        gamma, beta, mean, var = p
        s = gamma / jnp.sqrt(var + 1e-5)
        return y * s[None, :, None] + (beta - mean * s)[None, :, None]

    out = lax.conv_general_dilated(x_ncl, params["w1"], (1,), "VALID",
                                   dimension_numbers=dn)
    out = jax.nn.relu(bn(out, params["bn1"]))
    out = lax.conv_general_dilated(out, params["w2"], (1,), [(1, 1)],
                                   dimension_numbers=dn)
    out = jax.nn.relu(bn(out, params["bn2"]))
    out = lax.conv_general_dilated(out, params["w3"], (1,), "VALID",
                                   dimension_numbers=dn)
    out = bn(out, params["bn3"])
    return jax.nn.relu(out + x_ncl)


def make_params(key, inplanes, planes, base_width=64, groups=1, expansion=4):
    width = int(planes * (base_width / 64.0)) * groups
    out_planes = planes * expansion
    ks = jax.random.split(key, 6)

    def bn_params(k, c):
        k1, k2, k3, k4 = jax.random.split(k, 4)
        gamma = 1.0 + 0.1 * jax.random.normal(k1, (c,), jnp.float32)
        beta = 0.1 * jax.random.normal(k2, (c,), jnp.float32)
        mean = 0.1 * jax.random.normal(k3, (c,), jnp.float32)
        var = jnp.abs(jax.random.normal(k4, (c,), jnp.float32)) + 0.5
        return (gamma, beta, mean, var)

    return {
        "w1": 0.1 * jax.random.normal(ks[0], (width, inplanes, 1), jnp.float32),
        "w2": 0.1 * jax.random.normal(ks[1], (width, width, 3), jnp.float32),
        "w3": 0.1 * jax.random.normal(ks[2], (out_planes, width, 1), jnp.float32),
        "bn1": bn_params(ks[3], width),
        "bn2": bn_params(ks[4], width),
        "bn3": bn_params(ks[5], out_planes),
    }


if __name__ == "__main__":
    key = jax.random.PRNGKey(0)
    k_x, k_p = jax.random.split(key)

    N, planes, L = 2, 4, 16
    inplanes = planes * 4            # identity residual requires Cin == planes*expansion
    x = jax.random.normal(k_x, (N, inplanes, L), jnp.float32)   # NCL, like PyTorch Conv1d
    params = make_params(k_p, inplanes, planes)

    out = jax.block_until_ready(bottleneck_forward(x, params))

    ref = bottleneck_reference(x, params)
    assert out.shape == ref.shape == (N, inplanes, L)
    max_err = jnp.max(jnp.abs(out - ref))
    # bf16 activation I/O + bf16 matmul operands (f32 accumulation) -> loosened tol.
    assert jnp.allclose(out, ref, atol=7e-2, rtol=7e-2), f"max err {max_err}"

    print("KERNEL_OK")
</pallas_src>

<mosaic_0001>
module attributes {stable_mosaic.version = 11 : i64} {
  func.func @_bottleneck_kernel(%arg0: i32, %arg1: i32, %arg2: memref<1x16x128xbf16, #tpu.memory_space<vmem>>, %arg3: memref<1x1x8x128xbf16, #tpu.memory_space<vmem>>, %arg4: memref<128x128xbf16, #tpu.memory_space<vmem>>, %arg5: memref<1x128xf32, #tpu.memory_space<vmem>>, %arg6: memref<384x128xbf16, #tpu.memory_space<vmem>>, %arg7: memref<1x128xf32, #tpu.memory_space<vmem>>, %arg8: memref<128x128xbf16, #tpu.memory_space<vmem>>, %arg9: memref<1x128xf32, #tpu.memory_space<vmem>>, %arg10: memref<1x16x128xbf16, #tpu.memory_space<vmem>>) attributes {dimension_semantics = [#tpu.dimension_semantics<parallel>, #tpu.dimension_semantics<parallel>], iteration_bounds = array<i64: 2, 1>, scalar_prefetch = 0 : i64, scratch_operands = 0 : i64, tpu.core_type = #tpu.core_type<tc>, window_params = [{transform_indices = @transform_0, window_bounds = array<i64: 1, 16, 128>}, {transform_indices = @transform_1, window_bounds = array<i64: 1, 1, 8, 128>}, {pipeline_mode = #tpu.pipeline_mode<synchronous>, transform_indices = @transform_2, window_bounds = array<i64: 128, 128>}, {pipeline_mode = #tpu.pipeline_mode<synchronous>, transform_indices = @transform_3, window_bounds = array<i64: 1, 128>}, {pipeline_mode = #tpu.pipeline_mode<synchronous>, transform_indices = @transform_4, window_bounds = array<i64: 384, 128>}, {pipeline_mode = #tpu.pipeline_mode<synchronous>, transform_indices = @transform_5, window_bounds = array<i64: 1, 128>}, {pipeline_mode = #tpu.pipeline_mode<synchronous>, transform_indices = @transform_6, window_bounds = array<i64: 128, 128>}, {pipeline_mode = #tpu.pipeline_mode<synchronous>, transform_indices = @transform_7, window_bounds = array<i64: 1, 128>}, {transform_indices = @transform_8, window_bounds = array<i64: 1, 16, 128>}]} {
    %c0 = arith.constant 0 : index
    %c0_0 = arith.constant 0 : index
    %c0_1 = arith.constant 0 : index
    %0 = vector.load %arg2[%c0, %c0_0, %c0_1] : memref<1x16x128xbf16, #tpu.memory_space<vmem>>, vector<1x16x128xbf16>
    %1 = vector.shape_cast %0 : vector<1x16x128xbf16> to vector<16x128xbf16>
    %c0_2 = arith.constant 0 : index
    %c0_3 = arith.constant 0 : index
    %c0_4 = arith.constant 0 : index
    %c0_5 = arith.constant 0 : index
    %2 = vector.load %arg3[%c0_2, %c0_3, %c0_4, %c0_5] : memref<1x1x8x128xbf16, #tpu.memory_space<vmem>>, vector<1x1x8x128xbf16>
    %3 = vector.shape_cast %2 : vector<1x1x8x128xbf16> to vector<8x128xbf16>
    %4 = tpu.concatenate %1, %3 in 0 : vector<16x128xbf16>, vector<8x128xbf16> -> vector<24x128xbf16>
    %c0_6 = arith.constant 0 : index
    %c0_7 = arith.constant 0 : index
    %5 = vector.load %arg4[%c0_6, %c0_7] : memref<128x128xbf16, #tpu.memory_space<vmem>>, vector<128x128xbf16>
    %cst = arith.constant dense<0.000000e+00> : vector<24x128xf32>
    %6 = tpu.matmul %4, %5, %cst {dimension_numbers = #tpu.dot_dimension_numbers<[1], [0], [0], [1], [0, 0, 1, 1], [], []>} : vector<24x128xbf16>, vector<128x128xbf16>, vector<24x128xf32> -> vector<24x128xf32>
    %c0_8 = arith.constant 0 : index
    %c0_9 = arith.constant 0 : index
    %7 = vector.load %arg5[%c0_8, %c0_9] : memref<1x128xf32, #tpu.memory_space<vmem>>, vector<1x128xf32>
    %8 = vector.broadcast %7 : vector<1x128xf32> to vector<24x128xf32>
    %9 = arith.addf %6, %8 : vector<24x128xf32>
    %cst_10 = arith.constant 0.000000e+00 : f32
    %10 = vector.broadcast %cst_10 : f32 to vector<24x128xf32>
    %11 = arith.maximumf %9, %10 : vector<24x128xf32>
    %c0_i32 = arith.constant 0 : i32
    %12 = arith.cmpi sgt, %arg1, %c0_i32 : i32
    %13 = arith.extui %12 : i1 to i32
    %14 = arith.sitofp %13 : i32 to f32
    %c1_i32 = arith.constant 1 : i32
    %15 = arith.addi %arg1, %c1_i32 : i32
    %c16_i32 = arith.constant 16 : i32
    %16 = arith.muli %15, %c16_i32 : i32
    %c16_i32_11 = arith.constant 16 : i32
    %17 = arith.cmpi slt, %16, %c16_i32_11 : i32
    %18 = arith.extui %17 : i1 to i32
    %19 = arith.sitofp %18 : i32 to f32
    %20 = vector.extract_strided_slice %11 {offsets = [0, 0], sizes = [16, 128], strides = [1, 1]} : vector<24x128xf32> to vector<16x128xf32>
    %21 = arith.truncf %20 : vector<16x128xf32> to vector<16x128xbf16>
    %22 = vector.extract_strided_slice %11 {offsets = [16, 0], sizes = [1, 128], strides = [1, 1]} : vector<24x128xf32> to vector<1x128xf32>
    %23 = vector.broadcast %14 : f32 to vector<1x128xf32>
    %24 = arith.mulf %22, %23 : vector<1x128xf32>
    %25 = arith.truncf %24 : vector<1x128xf32> to vector<1x128xbf16>
    %26 = vector.extract_strided_slice %11 {offsets = [17, 0], sizes = [1, 128], strides = [1, 1]} : vector<24x128xf32> to vector<1x128xf32>
    %27 = vector.broadcast %19 : f32 to vector<1x128xf32>
    %28 = arith.mulf %26, %27 : vector<1x128xf32>
    %29 = arith.truncf %28 : vector<1x128xf32> to vector<1x128xbf16>
    %30 = vector.extract_strided_slice %21 {offsets = [0, 0], sizes = [15, 128], strides = [1, 1]} : vector<16x128xbf16> to vector<15x128xbf16>
    %31 = tpu.concatenate %25, %30 in 0 : vector<1x128xbf16>, vector<15x128xbf16> -> vector<16x128xbf16>
    %32 = vector.extract_strided_slice %21 {offsets = [1, 0], sizes = [15, 128], strides = [1, 1]} : vector<16x128xbf16> to vector<15x128xbf16>
    %33 = tpu.concatenate %32, %29 in 0 : vector<15x128xbf16>, vector<1x128xbf16> -> vector<16x128xbf16>
    %34 = tpu.concatenate %31, %21, %33 in 1 : vector<16x128xbf16>, vector<16x128xbf16>, vector<16x128xbf16> -> vector<16x384xbf16>
    %c0_12 = arith.constant 0 : index
    %c0_13 = arith.constant 0 : index
    %35 = vector.load %arg6[%c0_12, %c0_13] : memref<384x128xbf16, #tpu.memory_space<vmem>>, vector<384x128xbf16>
    %cst_14 = arith.constant dense<0.000000e+00> : vector<16x128xf32>
    %36 = tpu.matmul %34, %35, %cst_14 {dimension_numbers = #tpu.dot_dimension_numbers<[1], [0], [0], [1], [0, 0, 1, 1], [], []>} : vector<16x384xbf16>, vector<384x128xbf16>, vector<16x128xf32> -> vector<16x128xf32>
    %c0_15 = arith.constant 0 : index
    %c0_16 = arith.constant 0 : index
    %37 = vector.load %arg7[%c0_15, %c0_16] : memref<1x128xf32, #tpu.memory_space<vmem>>, vector<1x128xf32>
    %38 = vector.broadcast %37 : vector<1x128xf32> to vector<16x128xf32>
    %39 = arith.addf %36, %38 : vector<16x128xf32>
    %cst_17 = arith.constant 0.000000e+00 : f32
    %40 = vector.broadcast %cst_17 : f32 to vector<16x128xf32>
    %41 = arith.maximumf %39, %40 : vector<16x128xf32>
    %42 = arith.truncf %41 : vector<16x128xf32> to vector<16x128xbf16>
    %c0_18 = arith.constant 0 : index
    %c0_19 = arith.constant 0 : index
    %43 = vector.load %arg8[%c0_18, %c0_19] : memref<128x128xbf16, #tpu.memory_space<vmem>>, vector<128x128xbf16>
    %cst_20 = arith.constant dense<0.000000e+00> : vector<16x128xf32>
    %44 = tpu.matmul %42, %43, %cst_20 {dimension_numbers = #tpu.dot_dimension_numbers<[1], [0], [0], [1], [0, 0, 1, 1], [], []>} : vector<16x128xbf16>, vector<128x128xbf16>, vector<16x128xf32> -> vector<16x128xf32>
    %c0_21 = arith.constant 0 : index
    %c0_22 = arith.constant 0 : index
    %45 = vector.load %arg9[%c0_21, %c0_22] : memref<1x128xf32, #tpu.memory_space<vmem>>, vector<1x128xf32>
    %46 = vector.broadcast %45 : vector<1x128xf32> to vector<16x128xf32>
    %47 = arith.addf %44, %46 : vector<16x128xf32>
    %48 = arith.extf %1 : vector<16x128xbf16> to vector<16x128xf32>
    %49 = arith.addf %47, %48 : vector<16x128xf32>
    %cst_23 = arith.constant 0.000000e+00 : f32
    %50 = vector.broadcast %cst_23 : f32 to vector<16x128xf32>
    %51 = arith.maximumf %49, %50 : vector<16x128xf32>
    %52 = arith.truncf %51 : vector<16x128xf32> to vector<16x128xbf16>
    %c0_24 = arith.constant 0 : index
    %c0_25 = arith.constant 0 : index
    %c0_26 = arith.constant 0 : index
    %53 = vector.load %arg10[%c0_24, %c0_25, %c0_26] : memref<1x16x128xbf16, #tpu.memory_space<vmem>>, vector<1x16x128xbf16>
    %54 = vector.shape_cast %53 : vector<1x16x128xbf16> to vector<16x128xbf16>
    %55 = vector.shape_cast %52 : vector<16x128xbf16> to vector<1x16x128xbf16>
    tpu.vector_store %arg10[%c0_24, %c0_25, %c0_26], %55 {strides = array<i32>} : memref<1x16x128xbf16, #tpu.memory_space<vmem>>, vector<1x16x128xbf16>,
    return
  }
  func.func @transform_0(%arg0: i32, %arg1: i32) -> (i32, i32, i32) {
    %c0_i32 = arith.constant 0 : i32
    %c0_i32_0 = arith.constant 0 : i32
    return %arg0, %arg1, %c0_i32 : i32, i32, i32
  }
  func.func @transform_1(%arg0: i32, %arg1: i32) -> (i32, i32, i32, i32) {
    %c0_i32 = arith.constant 0 : i32
    %c0_i32_0 = arith.constant 0 : i32
    %c0_i32_1 = arith.constant 0 : i32
    return %arg0, %arg1, %c0_i32, %c0_i32_0 : i32, i32, i32, i32
  }
  func.func @transform_2(%arg0: i32, %arg1: i32) -> (i32, i32) {
    %c0_i32 = arith.constant 0 : i32
    %c0_i32_0 = arith.constant 0 : i32
    %c0_i32_1 = arith.constant 0 : i32
    return %c0_i32, %c0_i32_0 : i32, i32
  }
  func.func @transform_3(%arg0: i32, %arg1: i32) -> (i32, i32) {
    %c0_i32 = arith.constant 0 : i32
    %c0_i32_0 = arith.constant 0 : i32
    %c0_i32_1 = arith.constant 0 : i32
    return %c0_i32, %c0_i32_0 : i32, i32
  }
  func.func @transform_4(%arg0: i32, %arg1: i32) -> (i32, i32) {
    %c0_i32 = arith.constant 0 : i32
    %c0_i32_0 = arith.constant 0 : i32
    %c0_i32_1 = arith.constant 0 : i32
    return %c0_i32, %c0_i32_0 : i32, i32
  }
  func.func @transform_5(%arg0: i32, %arg1: i32) -> (i32, i32) {
    %c0_i32 = arith.constant 0 : i32
    %c0_i32_0 = arith.constant 0 : i32
    %c0_i32_1 = arith.constant 0 : i32
    return %c0_i32, %c0_i32_0 : i32, i32
  }
  func.func @transform_6(%arg0: i32, %arg1: i32) -> (i32, i32) {
    %c0_i32 = arith.constant 0 : i32
    %c0_i32_0 = arith.constant 0 : i32
    %c0_i32_1 = arith.constant 0 : i32
    return %c0_i32, %c0_i32_0 : i32, i32
  }
  func.func @transform_7(%arg0: i32, %arg1: i32) -> (i32, i32) {
    %c0_i32 = arith.constant 0 : i32
    %c0_i32_0 = arith.constant 0 : i32
    %c0_i32_1 = arith.constant 0 : i32
    return %c0_i32, %c0_i32_0 : i32, i32
  }
  func.func @transform_8(%arg0: i32, %arg1: i32) -> (i32, i32, i32) {
    %c0_i32 = arith.constant 0 : i32
    %c0_i32_0 = arith.constant 0 : i32
    return %arg0, %arg1, %c0_i32 : i32, i32, i32
  }
}

module attributes {stable_mosaic.version = 11 : i64} {
  func.func @_bottleneck_kernel(%arg0: i32, %arg1: i32, %arg2: memref<1x16x128xbf16, #tpu.memory_space<vmem>>, %arg3: memref<1x1x8x128xbf16, #tpu.memory_space<vmem>>, %arg4: memref<128x128xbf16, #tpu.memory_space<vmem>>, %arg5: memref<1x128xf32, #tpu.memory_space<vmem>>, %arg6: memref<384x128xbf16, #tpu.memory_space<vmem>>, %arg7: memref<1x128xf32, #tpu.memory_space<vmem>>, %arg8: memref<128x128xbf16, #tpu.memory_space<vmem>>, %arg9: memref<1x128xf32, #tpu.memory_space<vmem>>, %arg10: memref<1x16x128xbf16, #tpu.memory_space<vmem>>) attributes {dimension_semantics = [#tpu.dimension_semantics<parallel>, #tpu.dimension_semantics<parallel>], iteration_bounds = array<i64: 2, 1>, scalar_prefetch = 0 : i64, scratch_operands = 0 : i64, tpu.core_type = #tpu.core_type<tc>, window_params = [{transform_indices = @transform_0, window_bounds = array<i64: 1, 16, 128>}, {transform_indices = @transform_1, window_bounds = array<i64: 1, 1, 8, 128>}, {pipeline_mode = #tpu.pipeline_mode<synchronous>, transform_indices = @transform_2, window_bounds = array<i64: 128, 128>}, {pipeline_mode = #tpu.pipeline_mode<synchronous>, transform_indices = @transform_3, window_bounds = array<i64: 1, 128>}, {pipeline_mode = #tpu.pipeline_mode<synchronous>, transform_indices = @transform_4, window_bounds = array<i64: 384, 128>}, {pipeline_mode = #tpu.pipeline_mode<synchronous>, transform_indices = @transform_5, window_bounds = array<i64: 1, 128>}, {pipeline_mode = #tpu.pipeline_mode<synchronous>, transform_indices = @transform_6, window_bounds = array<i64: 128, 128>}, {pipeline_mode = #tpu.pipeline_mode<synchronous>, transform_indices = @transform_7, window_bounds = array<i64: 1, 128>}, {transform_indices = @transform_8, window_bounds = array<i64: 1, 16, 128>}]} {
    %c0 = arith.constant 0 : index
    %c0_0 = arith.constant 0 : index
    %c0_1 = arith.constant 0 : index
    %0 = vector.load %arg2[%c0, %c0_0, %c0_1] : memref<1x16x128xbf16, #tpu.memory_space<vmem>>, vector<1x16x128xbf16>
    %1 = vector.shape_cast %0 : vector<1x16x128xbf16> to vector<16x128xbf16>
    %c0_2 = arith.constant 0 : index
    %c0_3 = arith.constant 0 : index
    %c0_4 = arith.constant 0 : index
    %c0_5 = arith.constant 0 : index
    %2 = vector.load %arg3[%c0_2, %c0_3, %c0_4, %c0_5] : memref<1x1x8x128xbf16, #tpu.memory_space<vmem>>, vector<1x1x8x128xbf16>
    %3 = vector.shape_cast %2 : vector<1x1x8x128xbf16> to vector<8x128xbf16>
    %4 = tpu.concatenate %1, %3 in 0 : vector<16x128xbf16>, vector<8x128xbf16> -> vector<24x128xbf16>
    %c0_6 = arith.constant 0 : index
    %c0_7 = arith.constant 0 : index
    %5 = vector.load %arg4[%c0_6, %c0_7] : memref<128x128xbf16, #tpu.memory_space<vmem>>, vector<128x128xbf16>
    %cst = arith.constant dense<0.000000e+00> : vector<24x128xf32>
    %6 = tpu.matmul %4, %5, %cst {dimension_numbers = #tpu.dot_dimension_numbers<[1], [0], [0], [1], [0, 0, 1, 1], [], []>} : vector<24x128xbf16>, vector<128x128xbf16>, vector<24x128xf32> -> vector<24x128xf32>
    %c0_8 = arith.constant 0 : index
    %c0_9 = arith.constant 0 : index
    %7 = vector.load %arg5[%c0_8, %c0_9] : memref<1x128xf32, #tpu.memory_space<vmem>>, vector<1x128xf32>
    %8 = vector.broadcast %7 : vector<1x128xf32> to vector<24x128xf32>
    %9 = arith.addf %6, %8 : vector<24x128xf32>
    %cst_10 = arith.constant 0.000000e+00 : f32
    %10 = vector.broadcast %cst_10 : f32 to vector<24x128xf32>
    %11 = arith.maximumf %9, %10 : vector<24x128xf32>
    %c0_i32 = arith.constant 0 : i32
    %12 = arith.cmpi sgt, %arg1, %c0_i32 : i32
    %13 = arith.extui %12 : i1 to i32
    %14 = arith.sitofp %13 : i32 to f32
    %c1_i32 = arith.constant 1 : i32
    %15 = arith.addi %arg1, %c1_i32 : i32
    %c16_i32 = arith.constant 16 : i32
    %16 = arith.muli %15, %c16_i32 : i32
    %c16_i32_11 = arith.constant 16 : i32
    %17 = arith.cmpi slt, %16, %c16_i32_11 : i32
    %18 = arith.extui %17 : i1 to i32
    %19 = arith.sitofp %18 : i32 to f32
    %20 = vector.extract_strided_slice %11 {offsets = [0, 0], sizes = [16, 128], strides = [1, 1]} : vector<24x128xf32> to vector<16x128xf32>
    %21 = arith.truncf %20 : vector<16x128xf32> to vector<16x128xbf16>
    %22 = vector.extract_strided_slice %11 {offsets = [16, 0], sizes = [1, 128], strides = [1, 1]} : vector<24x128xf32> to vector<1x128xf32>
    %23 = vector.broadcast %14 : f32 to vector<1x128xf32>
    %24 = arith.mulf %22, %23 : vector<1x128xf32>
    %25 = arith.truncf %24 : vector<1x128xf32> to vector<1x128xbf16>
    %26 = vector.extract_strided_slice %11 {offsets = [17, 0], sizes = [1, 128], strides = [1, 1]} : vector<24x128xf32> to vector<1x128xf32>
    %27 = vector.broadcast %19 : f32 to vector<1x128xf32>
    %28 = arith.mulf %26, %27 : vector<1x128xf32>
    %29 = arith.truncf %28 : vector<1x128xf32> to vector<1x128xbf16>
    %30 = vector.extract_strided_slice %21 {offsets = [0, 0], sizes = [15, 128], strides = [1, 1]} : vector<16x128xbf16> to vector<15x128xbf16>
    %31 = tpu.concatenate %25, %30 in 0 : vector<1x128xbf16>, vector<15x128xbf16> -> vector<16x128xbf16>
    %32 = vector.extract_strided_slice %21 {offsets = [1, 0], sizes = [15, 128], strides = [1, 1]} : vector<16x128xbf16> to vector<15x128xbf16>
    %33 = tpu.concatenate %32, %29 in 0 : vector<15x128xbf16>, vector<1x128xbf16> -> vector<16x128xbf16>
    %34 = tpu.concatenate %31, %21, %33 in 1 : vector<16x128xbf16>, vector<16x128xbf16>, vector<16x128xbf16> -> vector<16x384xbf16>
    %c0_12 = arith.constant 0 : index
    %c0_13 = arith.constant 0 : index
    %35 = vector.load %arg6[%c0_12, %c0_13] : memref<384x128xbf16, #tpu.memory_space<vmem>>, vector<384x128xbf16>
    %cst_14 = arith.constant dense<0.000000e+00> : vector<16x128xf32>
    %36 = tpu.matmul %34, %35, %cst_14 {dimension_numbers = #tpu.dot_dimension_numbers<[1], [0], [0], [1], [0, 0, 1, 1], [], []>} : vector<16x384xbf16>, vector<384x128xbf16>, vector<16x128xf32> -> vector<16x128xf32>
    %c0_15 = arith.constant 0 : index
    %c0_16 = arith.constant 0 : index
    %37 = vector.load %arg7[%c0_15, %c0_16] : memref<1x128xf32, #tpu.memory_space<vmem>>, vector<1x128xf32>
    %38 = vector.broadcast %37 : vector<1x128xf32> to vector<16x128xf32>
    %39 = arith.addf %36, %38 : vector<16x128xf32>
    %cst_17 = arith.constant 0.000000e+00 : f32
    %40 = vector.broadcast %cst_17 : f32 to vector<16x128xf32>
    %41 = arith.maximumf %39, %40 : vector<16x128xf32>
    %42 = arith.truncf %41 : vector<16x128xf32> to vector<16x128xbf16>
    %c0_18 = arith.constant 0 : index
    %c0_19 = arith.constant 0 : index
    %43 = vector.load %arg8[%c0_18, %c0_19] : memref<128x128xbf16, #tpu.memory_space<vmem>>, vector<128x128xbf16>
    %cst_20 = arith.constant dense<0.000000e+00> : vector<16x128xf32>
    %44 = tpu.matmul %42, %43, %cst_20 {dimension_numbers = #tpu.dot_dimension_numbers<[1], [0], [0], [1], [0, 0, 1, 1], [], []>} : vector<16x128xbf16>, vector<128x128xbf16>, vector<16x128xf32> -> vector<16x128xf32>
    %c0_21 = arith.constant 0 : index
    %c0_22 = arith.constant 0 : index
    %45 = vector.load %arg9[%c0_21, %c0_22] : memref<1x128xf32, #tpu.memory_space<vmem>>, vector<1x128xf32>
    %46 = vector.broadcast %45 : vector<1x128xf32> to vector<16x128xf32>
    %47 = arith.addf %44, %46 : vector<16x128xf32>
    %48 = arith.extf %1 : vector<16x128xbf16> to vector<16x128xf32>
    %49 = arith.addf %47, %48 : vector<16x128xf32>
    %cst_23 = arith.constant 0.000000e+00 : f32
    %50 = vector.broadcast %cst_23 : f32 to vector<16x128xf32>
    %51 = arith.maximumf %49, %50 : vector<16x128xf32>
    %52 = arith.truncf %51 : vector<16x128xf32> to vector<16x128xbf16>
    %c0_24 = arith.constant 0 : index
    %c0_25 = arith.constant 0 : index
    %c0_26 = arith.constant 0 : index
    %53 = vector.load %arg10[%c0_24, %c0_25, %c0_26] : memref<1x16x128xbf16, #tpu.memory_space<vmem>>, vector<1x16x128xbf16>
    %54 = vector.shape_cast %53 : vector<1x16x128xbf16> to vector<16x128xbf16>
    %55 = vector.shape_cast %52 : vector<16x128xbf16> to vector<1x16x128xbf16>
    tpu.vector_store %arg10[%c0_24, %c0_25, %c0_26], %55 {strides = array<i32>} : memref<1x16x128xbf16, #tpu.memory_space<vmem>>, vector<1x16x128xbf16>,
    return
  }
  func.func @transform_0(%arg0: i32, %arg1: i32) -> (i32, i32, i32) {
    %c0_i32 = arith.constant 0 : i32
    %c0_i32_0 = arith.constant 0 : i32
    return %arg0, %arg1, %c0_i32 : i32, i32, i32
  }
  func.func @transform_1(%arg0: i32, %arg1: i32) -> (i32, i32, i32, i32) {
    %c0_i32 = arith.constant 0 : i32
    %c0_i32_0 = arith.constant 0 : i32
    %c0_i32_1 = arith.constant 0 : i32
    return %arg0, %arg1, %c0_i32, %c0_i32_0 : i32, i32, i32, i32
  }
  func.func @transform_2(%arg0: i32, %arg1: i32) -> (i32, i32) {
    %c0_i32 = arith.constant 0 : i32
    %c0_i32_0 = arith.constant 0 : i32
    %c0_i32_1 = arith.constant 0 : i32
    return %c0_i32, %c0_i32_0 : i32, i32
  }
  func.func @transform_3(%arg0: i32, %arg1: i32) -> (i32, i32) {
    %c0_i32 = arith.constant 0 : i32
    %c0_i32_0 = arith.constant 0 : i32
    %c0_i32_1 = arith.constant 0 : i32
    return %c0_i32, %c0_i32_0 : i32, i32
  }
  func.func @transform_4(%arg0: i32, %arg1: i32) -> (i32, i32) {
    %c0_i32 = arith.constant 0 : i32
    %c0_i32_0 = arith.constant 0 : i32
    %c0_i32_1 = arith.constant 0 : i32
    return %c0_i32, %c0_i32_0 : i32, i32
  }
  func.func @transform_5(%arg0: i32, %arg1: i32) -> (i32, i32) {
    %c0_i32 = arith.constant 0 : i32
    %c0_i32_0 = arith.constant 0 : i32
    %c0_i32_1 = arith.constant 0 : i32
    return %c0_i32, %c0_i32_0 : i32, i32
  }
  func.func @transform_6(%arg0: i32, %arg1: i32) -> (i32, i32) {
    %c0_i32 = arith.constant 0 : i32
    %c0_i32_0 = arith.constant 0 : i32
    %c0_i32_1 = arith.constant 0 : i32
    return %c0_i32, %c0_i32_0 : i32, i32
  }
  func.func @transform_7(%arg0: i32, %arg1: i32) -> (i32, i32) {
    %c0_i32 = arith.constant 0 : i32
    %c0_i32_0 = arith.constant 0 : i32
    %c0_i32_1 = arith.constant 0 : i32
    return %c0_i32, %c0_i32_0 : i32, i32
  }
  func.func @transform_8(%arg0: i32, %arg1: i32) -> (i32, i32, i32) {
    %c0_i32 = arith.constant 0 : i32
    %c0_i32_0 = arith.constant 0 : i32
    return %arg0, %arg1, %c0_i32 : i32, i32, i32
  }
}

</mosaic_0001>

<llo_original>
// kernel: tpu_custom_call.1
$region0: #{tpu_custom_call.1}
  #allocation0 [shape = 'u32[]', space=smem, size = 0x4, offset = 0x4, fixed_abs, tag = 'smem constant byte address 0x4 - core index']
  #allocation1 [shape = 'u32[144,128]{1,0:T(1,128)}', space=vmem, size = 0x12000, scoped, tag = 'internal scratch']
  %s0 = inlined_call_operand.hbm [shape: bf16[2,16,128], index: 0, kind: input, shape index: {}]
  %s1 = inlined_call_operand.hbm [shape: bf16[2,1,8,128], index: 1, kind: input, shape index: {}]
  %s2 = inlined_call_operand.hbm [shape: bf16[128,128], index: 2, kind: input, shape index: {}]
  %s3 = inlined_call_operand.vmem [shape: f32[1,128], index: 3, kind: input, shape index: {}]
  %s4 = inlined_call_operand.hbm [shape: bf16[384,128], index: 4, kind: input, shape index: {}]
  %s5 = inlined_call_operand.vmem [shape: f32[1,128], index: 5, kind: input, shape index: {}]
  %s6 = inlined_call_operand.hbm [shape: bf16[128,128], index: 6, kind: input, shape index: {}]
  %s7 = inlined_call_operand.vmem [shape: f32[1,128], index: 7, kind: input, shape index: {}]
  %s8 = inlined_call_operand.hbm [shape: bf16[2,16,128], index: 8, kind: output, shape index: {}]
  %s9 = sld [smem:[#allocation0]]
  $region85: #{tpu_custom_call.1} parent=0
    _
  %s11 = ssub.s32 1, %s9
  %s12 = scalar_select 0, %s11, %s9
  $region1: #{tpu_custom_call.1} parent=0
    #allocation2 [shape = 'u8[8192]{0}', space=vmem, size = 0x2000, scoped, tag = 'input window, operand 0']
    #allocation3 [shape = 's32[2]{0}', space=sflag, size = 0x8, scoped, tag = 'scoped memory for tpu_custom_call.1']
    #allocation4 [shape = 's32[2]{0}', space=sflag, size = 0x8, scoped, tag = 'scoped memory for tpu_custom_call.1']
    #allocation5 [shape = 'u8[4096]{0}', space=vmem, size = 0x1000, scoped, tag = 'input window, operand 1']
    #allocation6 [shape = 's32[2]{0}', space=sflag, size = 0x8, scoped, tag = 'scoped memory for tpu_custom_call.1']
    #allocation7 [shape = 'u8[32768]{0}', space=vmem, size = 0x8000, scoped, tag = 'input window, operand 2, single buffered']
    #allocation8 [shape = 'u8[98304]{0}', space=vmem, size = 0x18000, scoped, tag = 'input window, operand 4, single buffered']
    #allocation9 [shape = 's32[1]{0}', space=sflag, size = 0x4, scoped, tag = 'scoped memory for tpu_custom_call.1']
    #allocation10 [shape = 'u8[32768]{0}', space=vmem, size = 0x8000, scoped, tag = 'input window, operand 6, single buffered']
    #allocation11 [shape = 'u8[8192]{0}', space=vmem, size = 0x2000, scoped, tag = 'output window, operand 0']
    %13 = vsyncpa [#allocation3], 0
    %s14 = scalar_lea.sflag [#allocation3], 1
    %15 = vsyncpa %s14, 0
    %16 = vsyncpa [#allocation6], 0
    %s17 = scalar_lea.sflag [#allocation6], 1
    %18 = vsyncpa %s17, 0
    %19 = vsyncpa [#allocation9], 0
    %20 = vsyncpa [#allocation4], 0
    %s21 = scalar_lea.sflag [#allocation4], 1
    %22 = vsyncpa %s21, 0
    loop: start=0, step=1, limit=4
    $region2: #{tpu_custom_call.1} parent=1 // loop_pre_header
      _
    $region3: #{tpu_custom_call.1} parent=1 // loop_header
      %s24 = sphi 0, %s28
      %p25 = scmp.ge.s32.totalorder %s24, 4
      %s31 = sphi 0, %s43
      %s32 = sphi 0, %s39
      %s33 = sphi 0, %s31
      %s34 = sphi 0, %s32
      %s35 = sphi 0, %s33
      %s36 = sphi 0, %s34
      %s48 = sphi 0, %s50
      %s51 = sphi 0, %s48
      %s52 = sphi 0, %s51
      %s68 = sphi 0, %s52
      %s76 = sphi 0, %s78
      %s79 = sphi 0, %s76
      %s80 = sphi 0, %s79
      %s96 = sphi 0, %s80
      %s100 = sphi 0, %s100
      %s102 = sphi 0, %s100
      %s103 = sphi 0, %s102
      %s117 = sphi 0, %s103
      %s121 = sphi 0, %s121
      %s123 = sphi 0, %s121
      %s124 = sphi 0, %s123
      %s138 = sphi 0, %s124
      %s142 = sphi 0, %s142
      %s144 = sphi 0, %s142
      %s145 = sphi 0, %s144
      %s159 = sphi 0, %s145
      %s163 = sphi 0, %s163
      %s165 = sphi 0, %s163
      %s166 = sphi 0, %s165
      %s180 = sphi 0, %s166
      %s184 = sphi 0, %s184
      %s186 = sphi 0, %s184
      %s187 = sphi 0, %s186
      %s201 = sphi 0, %s187
      %s205 = sphi 0, %s205
      %s207 = sphi 0, %s205
      %s208 = sphi 0, %s207
      %s222 = sphi 0, %s208
      %s230 = sphi 0, %s232
      %s233 = sphi 0, %s230
      %s234 = sphi 0, %s233
      %s250 = sphi 0, %s234
    $region4: #{tpu_custom_call.1} parent=1 // loop_header_branch
      %27 = sbr.rel (%p25) target = $region8
    $region5: #{tpu_custom_call.1} parent=1 // loop_body
      %s29 = ssub.s32 %s24, 1
      %s30 = ssub.s32 %s24, 2
      %s37 = sadd.s32 1, %s32
      %p38 = scmp.ge.s32.totalorder %s37, 1
      %s39 = scalar_select %p38, 0, %s37
      %s40 = sadd.s32 1, %s31
      %s41 = scalar_select %p38, %s40, %s31
      %p42 = scmp.ge.s32.totalorder %s41, 2
      %s43 = scalar_select %p42, 0, %s41
      %s44 = ssub.s32 %s31, %s43
      %s45 = ssub.s32 %s32, %s39
      %s46 = sor.u32 %s44, %s45
      %p47 = scmp.eq.s32.totalorder %s46, 0
      %s49 = sadd.s32 %s48, 1
      %s50 = scalar_select %p47, %s48, %s49
      %p53 = pneg %p47
      %p54 = scmp.eq.s32.totalorder %s24, 1
      %p55 = por %p53, %p54
      %p56 = scmp.ne.s32.totalorder %s48, %s51
      %p57 = scmp.eq.s32.totalorder %s24, 0
      %p58 = por %p56, %p57
      %p59 = scmp.ne.s32.totalorder %s48, %s51
      %p60 = scmp.eq.s32.totalorder %s29, 1
      %p61 = por %p59, %p60
      %p62 = scmp.ne.s32.totalorder %s51, %s52
      %p63 = scmp.eq.s32.totalorder %s29, 0
      %p64 = por %p62, %p63
      %p65 = scmp.ne.s32.totalorder %s51, %s52
      %p66 = scmp.eq.s32.totalorder %s30, 1
      %p67 = por %p65, %p66
      %p69 = scmp.ne.s32.totalorder %s52, %s68
      %p70 = scmp.eq.s32.totalorder %s30, 0
      %p71 = por %p69, %p70
      %s72 = ssub.s32 %s31, %s43
      %s73 = ssub.s32 %s32, %s39
      %s74 = sor.u32 %s72, %s73
      %p75 = scmp.eq.s32.totalorder %s74, 0
      %s77 = sadd.s32 %s76, 1
      %s78 = scalar_select %p75, %s76, %s77
      %p81 = pneg %p75
      %p82 = scmp.eq.s32.totalorder %s24, 1
      %p83 = por %p81, %p82
      %p84 = scmp.ne.s32.totalorder %s76, %s79
      %p85 = scmp.eq.s32.totalorder %s24, 0
      %p86 = por %p84, %p85
      %p87 = scmp.ne.s32.totalorder %s76, %s79
      %p88 = scmp.eq.s32.totalorder %s29, 1
      %p89 = por %p87, %p88
      %p90 = scmp.ne.s32.totalorder %s79, %s80
      %p91 = scmp.eq.s32.totalorder %s29, 0
      %p92 = por %p90, %p91
      %p93 = scmp.ne.s32.totalorder %s79, %s80
      %p94 = scmp.eq.s32.totalorder %s30, 1
      %p95 = por %p93, %p94
      %p97 = scmp.ne.s32.totalorder %s80, %s96
      %p98 = scmp.eq.s32.totalorder %s30, 0
      %p99 = por %p97, %p98
      %s101 = sadd.s32 %s100, 1
      %p104 = scmp.eq.s32.totalorder %s24, 1
      %p105 = scmp.ne.s32.totalorder %s100, %s102
      %p106 = scmp.eq.s32.totalorder %s24, 0
      %p107 = por %p105, %p106
      %p108 = scmp.ne.s32.totalorder %s100, %s102
      %p109 = scmp.eq.s32.totalorder %s29, 1
      %p110 = por %p108, %p109
      %p111 = scmp.ne.s32.totalorder %s102, %s103
      %p112 = scmp.eq.s32.totalorder %s29, 0
      %p113 = por %p111, %p112
      %p114 = scmp.ne.s32.totalorder %s102, %s103
      %p115 = scmp.eq.s32.totalorder %s30, 1
      %p116 = por %p114, %p115
      %p118 = scmp.ne.s32.totalorder %s103, %s117
      %p119 = scmp.eq.s32.totalorder %s30, 0
      %p120 = por %p118, %p119
      %s122 = sadd.s32 %s121, 1
      %p125 = scmp.eq.s32.totalorder %s24, 1
      %p126 = scmp.ne.s32.totalorder %s121, %s123
      %p127 = scmp.eq.s32.totalorder %s24, 0
      %p128 = por %p126, %p127
      %p129 = scmp.ne.s32.totalorder %s121, %s123
      %p130 = scmp.eq.s32.totalorder %s29, 1
      %p131 = por %p129, %p130
      %p132 = scmp.ne.s32.totalorder %s123, %s124
      %p133 = scmp.eq.s32.totalorder %s29, 0
      %p134 = por %p132, %p133
      %p135 = scmp.ne.s32.totalorder %s123, %s124
      %p136 = scmp.eq.s32.totalorder %s30, 1
      %p137 = por %p135, %p136
      %p139 = scmp.ne.s32.totalorder %s124, %s138
      %p140 = scmp.eq.s32.totalorder %s30, 0
      %p141 = por %p139, %p140
      %s143 = sadd.s32 %s142, 1
      %p146 = scmp.eq.s32.totalorder %s24, 1
      %p147 = scmp.ne.s32.totalorder %s142, %s144
      %p148 = scmp.eq.s32.totalorder %s24, 0
      %p149 = por %p147, %p148
      %p150 = scmp.ne.s32.totalorder %s142, %s144
      %p151 = scmp.eq.s32.totalorder %s29, 1
      %p152 = por %p150, %p151
      %p153 = scmp.ne.s32.totalorder %s144, %s145
      %p154 = scmp.eq.s32.totalorder %s29, 0
      %p155 = por %p153, %p154
      %p156 = scmp.ne.s32.totalorder %s144, %s145
      %p157 = scmp.eq.s32.totalorder %s30, 1
      %p158 = por %p156, %p157
      %p160 = scmp.ne.s32.totalorder %s145, %s159
      %p161 = scmp.eq.s32.totalorder %s30, 0
      %p162 = por %p160, %p161
      %s164 = sadd.s32 %s163, 1
      %p167 = scmp.eq.s32.totalorder %s24, 1
      %p168 = scmp.ne.s32.totalorder %s163, %s165
      %p169 = scmp.eq.s32.totalorder %s24, 0
      %p170 = por %p168, %p169
      %p171 = scmp.ne.s32.totalorder %s163, %s165
      %p172 = scmp.eq.s32.totalorder %s29, 1
      %p173 = por %p171, %p172
      %p174 = scmp.ne.s32.totalorder %s165, %s166
      %p175 = scmp.eq.s32.totalorder %s29, 0
      %p176 = por %p174, %p175
      %p177 = scmp.ne.s32.totalorder %s165, %s166
      %p178 = scmp.eq.s32.totalorder %s30, 1
      %p179 = por %p177, %p178
      %p181 = scmp.ne.s32.totalorder %s166, %s180
      %p182 = scmp.eq.s32.totalorder %s30, 0
      %p183 = por %p181, %p182
      %s185 = sadd.s32 %s184, 1
      %p188 = scmp.eq.s32.totalorder %s24, 1
      %p189 = scmp.ne.s32.totalorder %s184, %s186
      %p190 = scmp.eq.s32.totalorder %s24, 0
      %p191 = por %p189, %p190
      %p192 = scmp.ne.s32.totalorder %s184, %s186
      %p193 = scmp.eq.s32.totalorder %s29, 1
      %p194 = por %p192, %p193
      %p195 = scmp.ne.s32.totalorder %s186, %s187
      %p196 = scmp.eq.s32.totalorder %s29, 0
      %p197 = por %p195, %p196
      %p198 = scmp.ne.s32.totalorder %s186, %s187
      %p199 = scmp.eq.s32.totalorder %s30, 1
      %p200 = por %p198, %p199
      %p202 = scmp.ne.s32.totalorder %s187, %s201
      %p203 = scmp.eq.s32.totalorder %s30, 0
      %p204 = por %p202, %p203
      %s206 = sadd.s32 %s205, 1
      %p209 = scmp.eq.s32.totalorder %s24, 1
      %p210 = scmp.ne.s32.totalorder %s205, %s207
      %p211 = scmp.eq.s32.totalorder %s24, 0
      %p212 = por %p210, %p211
      %p213 = scmp.ne.s32.totalorder %s205, %s207
      %p214 = scmp.eq.s32.totalorder %s29, 1
      %p215 = por %p213, %p214
      %p216 = scmp.ne.s32.totalorder %s207, %s208
      %p217 = scmp.eq.s32.totalorder %s29, 0
      %p218 = por %p216, %p217
      %p219 = scmp.ne.s32.totalorder %s207, %s208
      %p220 = scmp.eq.s32.totalorder %s30, 1
      %p221 = por %p219, %p220
      %p223 = scmp.ne.s32.totalorder %s208, %s222
      %p224 = scmp.eq.s32.totalorder %s30, 0
      %p225 = por %p223, %p224
      %s226 = ssub.s32 %s31, %s43
      %s227 = ssub.s32 %s32, %s39
      %s228 = sor.u32 %s226, %s227
      %p229 = scmp.eq.s32.totalorder %s228, 0
      %s231 = sadd.s32 %s230, 1
      %s232 = scalar_select %p229, %s230, %s231
      %p235 = pneg %p229
      %p236 = scmp.eq.s32.totalorder %s24, 1
      %p237 = por %p235, %p236
      %p238 = scmp.ne.s32.totalorder %s230, %s233
      %p239 = scmp.eq.s32.totalorder %s24, 0
      %p240 = por %p238, %p239
      %p241 = scmp.ne.s32.totalorder %s230, %s233
      %p242 = scmp.eq.s32.totalorder %s29, 1
      %p243 = por %p241, %p242
      %p244 = scmp.ne.s32.totalorder %s233, %s234
      %p245 = scmp.eq.s32.totalorder %s29, 0
      %p246 = por %p244, %p245
      %p247 = scmp.ne.s32.totalorder %s233, %s234
      %p248 = scmp.eq.s32.totalorder %s30, 1
      %p249 = por %p247, %p248
      %p251 = scmp.ne.s32.totalorder %s234, %s250
      %p252 = scmp.eq.s32.totalorder %s30, 0
      %p253 = por %p251, %p252
      %p254 = scmp.le.s32.totalorder 1, %s24
      %p255 = scmp.lt.s32.totalorder %s24, 3
      %p256 = pnand %p254, %p255
      %p257 = pneg %p256
      // Predicated region
      $region9: #{tpu_custom_call.1} parent=5 // pred_check
        _
      $region10: #{tpu_custom_call.1} parent=5 // pred_check_branch
        %259 = sbr.rel (%p256) target = $region12
      $region11: #{tpu_custom_call.1} parent=5 // pred_region
        %s260 = ssub.s32 %s24, 1
        // Predicated region
        $region13: #{tpu_custom_call.1} parent=11 // pred_check
          %p261 = pneg %p113
        $region14: #{tpu_custom_call.1} parent=11 // pred_check_branch
          %263 = sbr.rel (%p261) target = $region16
        $region15: #{tpu_custom_call.1} parent=11 // pred_region
          %s265 = ssub.s32 1024, 1024
          %266 = vsyncadd [#allocation6], %s265
          %s267 = sshll.u32 [#allocation7], 4
          %s268 = int_to_ptr.vmem [resolvable:$true] %s267
          %273 = dma.hbm_to_vmem [thread:$0]  %s2, 1024, %s268, [#allocation6], 64, 64, 4
        $region16: #{tpu_custom_call.1} parent=11 // pred_fallthru
          _
        // Predicated region
        $region17: #{tpu_custom_call.1} parent=11 // pred_check
          %p274 = pneg %p134
        $region18: #{tpu_custom_call.1} parent=11 // pred_check_branch
          %276 = sbr.rel (%p274) target = $region20
        $region19: #{tpu_custom_call.1} parent=11 // pred_region
          _
        $region20: #{tpu_custom_call.1} parent=11 // pred_fallthru
          _
        // Predicated region
        $region21: #{tpu_custom_call.1} parent=11 // pred_check
          %p277 = pneg %p155
        $region22: #{tpu_custom_call.1} parent=11 // pred_check_branch
          %279 = sbr.rel (%p277) target = $region24
        $region23: #{tpu_custom_call.1} parent=11 // pred_region
          %s281 = ssub.s32 3072, 3072
          %282 = vsyncadd [#allocation9], %s281
          %s283 = sshll.u32 [#allocation8], 4
          %s284 = int_to_ptr.vmem [resolvable:$true] %s283
          %289 = dma.hbm_to_vmem [thread:$0]  %s4, 3072, %s284, [#allocation9], 64, 64, 4
        $region24: #{tpu_custom_call.1} parent=11 // pred_fallthru
          _
        // Predicated region
        $region25: #{tpu_custom_call.1} parent=11 // pred_check
          %p290 = pneg %p176
        $region26: #{tpu_custom_call.1} parent=11 // pred_check_branch
          %292 = sbr.rel (%p290) target = $region28
        $region27: #{tpu_custom_call.1} parent=11 // pred_region
          _
        $region28: #{tpu_custom_call.1} parent=11 // pred_fallthru
          _
        // Predicated region
        $region29: #{tpu_custom_call.1} parent=11 // pred_check
          %p293 = pneg %p197
        $region30: #{tpu_custom_call.1} parent=11 // pred_check_branch
          %295 = sbr.rel (%p293) target = $region32
        $region31: #{tpu_custom_call.1} parent=11 // pred_region
          %s297 = ssub.s32 1024, 1024
          %298 = vsyncadd [#allocation9], %s297
          %s299 = sshll.u32 [#allocation10], 4
          %s300 = int_to_ptr.vmem [resolvable:$true] %s299
          %305 = dma.hbm_to_vmem [thread:$0]  %s6, 1024, %s300, [#allocation9], 64, 64, 4
        $region32: #{tpu_custom_call.1} parent=11 // pred_fallthru
          _
        // Predicated region
        $region33: #{tpu_custom_call.1} parent=11 // pred_check
          %p306 = pneg %p218
        $region34: #{tpu_custom_call.1} parent=11 // pred_check_branch
          %308 = sbr.rel (%p306) target = $region36
        $region35: #{tpu_custom_call.1} parent=11 // pred_region
          _
        $region36: #{tpu_custom_call.1} parent=11 // pred_fallthru
          _
      $region12: #{tpu_custom_call.1} parent=5 // pred_fallthru
        _
      %p309 = scmp.lt.s32.totalorder %s24, 2
      // Predicated region
      $region37: #{tpu_custom_call.1} parent=5 // pred_check
        %p310 = pneg %p309
      $region38: #{tpu_custom_call.1} parent=5 // pred_check_branch
        %312 = sbr.rel (%p310) target = $region40
      $region39: #{tpu_custom_call.1} parent=5 // pred_region
        // Predicated region
        $region41: #{tpu_custom_call.1} parent=39 // pred_check
          %p313 = pneg %p58
        $region42: #{tpu_custom_call.1} parent=39 // pred_check_branch
          %315 = sbr.rel (%p313) target = $region44
        $region43: #{tpu_custom_call.1} parent=39 // pred_region
          %s316 = sand.u32 %s48, 1
          %s317 = scalar_lea.sflag [#allocation3], %s316
          %s318 = sand.u32 %s48, 1
          %s319 = smul.addr %s318, 8
          %s320 = scalar_lea.vmem [#allocation2], %s319
          %s321 = smul.u32 2, %s32
          %s323 = ssub.s32 128, 128
          %324 = vsyncadd %s317, %s323
          %s325 = smul.addr %s31, 2
          %s326 = sadd.s32 %s321, %s325
          %s327 = smul.addr %s326, 64
          %s328 = scalar_lea.hbm %s0, %s327
          %s329 = sshll.u32 %s320, 4
          %s330 = int_to_ptr.vmem [resolvable:$true] %s329
          %335 = dma.hbm_to_vmem [thread:$0]  %s328, 128, %s330, %s317, 64, 64, 4
        $region44: #{tpu_custom_call.1} parent=39 // pred_fallthru
          _
        // Predicated region
        $region45: #{tpu_custom_call.1} parent=39 // pred_check
          %p336 = pneg %p86
        $region46: #{tpu_custom_call.1} parent=39 // pred_check_branch
          %338 = sbr.rel (%p336) target = $region48
        $region47: #{tpu_custom_call.1} parent=39 // pred_region
          %s339 = sand.u32 %s24, 1
          %s340 = scalar_lea.sflag [#allocation6], %s339
          %s341 = sand.u32 %s76, 1
          %s342 = smul.addr %s341, 4
          %s343 = scalar_lea.vmem [#allocation5], %s342
          %s345 = ssub.s32 64, 64
          %346 = vsyncadd %s340, %s345
          %s347 = sadd.s32 %s32, %s31
          %s348 = smul.addr %s347, 64
          %s349 = scalar_lea.hbm %s1, %s348
          %s351 = sshll.u32 %s343, 4
          %s352 = int_to_ptr.vmem [resolvable:$true] %s351
          %354 = dma.hbm_to_vmem [thread:$0]  %s349, 64, %s352, %s340
        $region48: #{tpu_custom_call.1} parent=39 // pred_fallthru
          _
      $region40: #{tpu_custom_call.1} parent=5 // pred_fallthru
        _
      %p355 = scmp.le.s32.totalorder 1, %s24
      %p356 = scmp.lt.s32.totalorder %s24, 3
      %p357 = pnand %p355, %p356
      %p358 = pneg %p357
      // Predicated region
      $region49: #{tpu_custom_call.1} parent=5 // pred_check
        _
      $region50: #{tpu_custom_call.1} parent=5 // pred_check_branch
        %360 = sbr.rel (%p357) target = $region52
      $region51: #{tpu_custom_call.1} parent=5 // pred_region
        %s361 = ssub.s32 %s24, 1
        %s362 = sand.u32 %s51, 1
        %s363 = scalar_lea.sflag [#allocation3], %s362
        %s364 = sand.u32 %s51, 1
        %s365 = smul.addr %s364, 8
        %s366 = scalar_lea.vmem [#allocation2], %s365
        // Predicated region
        $region53: #{tpu_custom_call.1} parent=51 // pred_check
          %p367 = pneg %p64
        $region54: #{tpu_custom_call.1} parent=51 // pred_check_branch
          %369 = sbr.rel (%p367) target = $region56
        $region55: #{tpu_custom_call.1} parent=51 // pred_region
          %370 = dma.done %s363, 128
        $region56: #{tpu_custom_call.1} parent=51 // pred_fallthru
          _
        %s371 = sand.u32 %s29, 1
        %s372 = scalar_lea.sflag [#allocation6], %s371
        %s373 = sand.u32 %s79, 1
        %s374 = smul.addr %s373, 4
        %s375 = scalar_lea.vmem [#allocation5], %s374
        // Predicated region
        $region57: #{tpu_custom_call.1} parent=51 // pred_check
          %p376 = pneg %p92
        $region58: #{tpu_custom_call.1} parent=51 // pred_check_branch
          %378 = sbr.rel (%p376) target = $region60
        $region59: #{tpu_custom_call.1} parent=51 // pred_region
          %379 = dma.done %s372, 64
        $region60: #{tpu_custom_call.1} parent=51 // pred_fallthru
          _
        // Predicated region
        $region61: #{tpu_custom_call.1} parent=51 // pred_check
          %p380 = pneg %p113
        $region62: #{tpu_custom_call.1} parent=51 // pred_check_branch
          %382 = sbr.rel (%p380) target = $region64
        $region63: #{tpu_custom_call.1} parent=51 // pred_region
          %383 = dma.done [#allocation6], 1024
        $region64: #{tpu_custom_call.1} parent=51 // pred_fallthru
          _
        // Predicated region
        $region65: #{tpu_custom_call.1} parent=51 // pred_check
          %p384 = pneg %p155
        $region66: #{tpu_custom_call.1} parent=51 // pred_check_branch
          %386 = sbr.rel (%p384) target = $region68
        $region67: #{tpu_custom_call.1} parent=51 // pred_region
          %387 = dma.done [#allocation9], 3072
        $region68: #{tpu_custom_call.1} parent=51 // pred_fallthru
          _
        // Predicated region
        $region69: #{tpu_custom_call.1} parent=51 // pred_check
          %p388 = pneg %p197
        $region70: #{tpu_custom_call.1} parent=51 // pred_check_branch
          %390 = sbr.rel (%p388) target = $region72
        $region71: #{tpu_custom_call.1} parent=51 // pred_region
          %391 = dma.done [#allocation9], 1024
        $region72: #{tpu_custom_call.1} parent=51 // pred_fallthru
          _
        %s392 = sand.u32 %s51, 1
        %s393 = scalar_lea.sflag [#allocation3], %s392
        %s394 = sand.u32 %s51, 1
        %s395 = smul.addr %s394, 8
        %s396 = scalar_lea.vmem [#allocation2], %s395
        %p397 = pneg %p64
        %p398 = pneg %p61
        %s399 = sand.u32 %s29, 1
        %s400 = scalar_lea.sflag [#allocation6], %s399
        %s401 = sand.u32 %s79, 1
        %s402 = smul.addr %s401, 4
        %s403 = scalar_lea.vmem [#allocation5], %s402
        %p404 = pneg %p92
        %p405 = pneg %p89
        %p406 = pneg %p113
        %p407 = pneg %p110
        %p408 = pneg %p134
        %p409 = pneg %p131
        %p410 = pneg %p155
        %p411 = pneg %p152
        %p412 = pneg %p176
        %p413 = pneg %p173
        %p414 = pneg %p197
        %p415 = pneg %p194
        %p416 = pneg %p218
        %p417 = pneg %p215
        %p418 = pneg %p246
        %p419 = pneg %p243
        %s420 = sand.u32 %s233, 1
        %s421 = scalar_lea.sflag [#allocation4], %s420
        %s422 = sand.u32 %s233, 1
        %s423 = smul.addr %s422, 8
        %s424 = scalar_lea.vmem [#allocation11], %s423
        %s425 = smul.u32 2, %s34
        %s426 = smul.u32 2, %s34
        %v428 = vld [vmem:[%s366] sm:$0xf]
        %v429 = vld [vmem:[%s366 + $0x4] sm:$0xf]
        %v430 = vld [vmem:[%s375] sm:$0xf]
        %v433 = vunpack.c.l.b16 %v428
        %v434 = vunpack.c.l.b16 %v429
        %v435 = vpack.c.b16 %v434, %v433
        %v437 = vld [vmem:[#allocation7] sm:$0xf]
        %v438 = vld [vmem:[#allocation7 + $0x4] sm:$0xf]
        %v439 = vld [vmem:[#allocation7 + $0x8] sm:$0xf]
        %v440 = vld [vmem:[#allocation7 + $0xc] sm:$0xf]
        %v441 = vld [vmem:[#allocation7 + $0x10] sm:$0xf]
        %v442 = vld [vmem:[#allocation7 + $0x14] sm:$0xf]
        %v443 = vld [vmem:[#allocation7 + $0x18] sm:$0xf]
        %v444 = vld [vmem:[#allocation7 + $0x1c] sm:$0xf]
        %v445 = vld [vmem:[#allocation7 + $0x20] sm:$0xf]
        %v446 = vld [vmem:[#allocation7 + $0x24] sm:$0xf]
        %v447 = vld [vmem:[#allocation7 + $0x28] sm:$0xf]
        %v448 = vld [vmem:[#allocation7 + $0x2c] sm:$0xf]
        %v449 = vld [vmem:[#allocation7 + $0x30] sm:$0xf]
        %v450 = vld [vmem:[#allocation7 + $0x34] sm:$0xf]
        %v451 = vld [vmem:[#allocation7 + $0x38] sm:$0xf]
        %v452 = vld [vmem:[#allocation7 + $0x3c] sm:$0xf]
        %v453 = vld [vmem:[%s3] sm:$0x1]
        %v455 = vlaneseq
        %v456 = vshrl.u32 %v455, 7
        %v457 = vsub.s32 0, %v456
        %v458 = vrot.slane %v453, %v457
        %v476 = vunpack.c.l.b16 %v437
        %v477 = vunpack.c.l.b16 %v438
        %v478 = vunpack.c.l.b16 %v439
        %v479 = vunpack.c.l.b16 %v440
        %v480 = vunpack.c.l.b16 %v441
        %v481 = vunpack.c.l.b16 %v442
        %v482 = vunpack.c.l.b16 %v443
        %v483 = vunpack.c.l.b16 %v444
        %v484 = vunpack.c.l.b16 %v445
        %v485 = vunpack.c.l.b16 %v446
        %v486 = vunpack.c.l.b16 %v447
        %v487 = vunpack.c.l.b16 %v448
        %v488 = vunpack.c.l.b16 %v449
        %v489 = vunpack.c.l.b16 %v450
        %v490 = vunpack.c.l.b16 %v451
        %v491 = vunpack.c.l.b16 %v452
        %v492 = vpack.c.b16 %v477, %v476
        %v493 = vpack.c.b16 %v479, %v478
        %v494 = vpack.c.b16 %v481, %v480
        %v495 = vpack.c.b16 %v483, %v482
        %v496 = vpack.c.b16 %v485, %v484
        %v497 = vpack.c.b16 %v487, %v486
        %v498 = vpack.c.b16 %v489, %v488
        %v499 = vpack.c.b16 %v491, %v490
        %508 = vmatprep.subr.bf16.mxu0 0
        %509 = vmatpush1.bf16.msra.mxu0 %v499
        %510 = vmatprep.subr.bf16.mxu0 0
        %511 = vmatpush1.bf16.msra.mxu0 %v498
        %512 = vmatprep.subr.bf16.mxu0 0
        %513 = vmatpush1.bf16.msra.mxu0 %v497
        %514 = vmatprep.subr.bf16.mxu0 0
        %515 = vmatpush1.bf16.msra.mxu0 %v496
        %516 = vmatprep.subr.bf16.mxu0 0
        %517 = vmatpush1.bf16.msra.mxu0 %v495
        %518 = vmatprep.subr.bf16.mxu0 0
        %519 = vmatpush1.bf16.msra.mxu0 %v494
        %520 = vmatprep.subr.bf16.mxu0 0
        %521 = vmatpush1.bf16.msra.mxu0 %v493
        %522 = vmatprep.subr.bf16.mxu0 0
        %523 = vmatpush1.bf16.msra.mxu0 %v492
        %524 = vmatprep.subr.bf16.mxu0 0
        %525 = vmatpush2.bf16.msra.mxu0 0
        %526 = vmatprep.subr.bf16.mxu0 0
        %527 = vmatpush2.bf16.msra.mxu0 0
        %528 = vmatprep.subr.bf16.mxu0 0
        %529 = vmatpush2.bf16.msra.mxu0 0
        %530 = vmatprep.subr.bf16.mxu0 0
        %531 = vmatpush2.bf16.msra.mxu0 0
        %532 = vmatprep.subr.bf16.mxu0 0
        %533 = vmatpush2.bf16.msra.mxu0 0
        %534 = vmatprep.subr.bf16.mxu0 0
        %535 = vmatpush2.bf16.msra.mxu0 0
        %536 = vmatprep.subr.bf16.mxu0 0
        %537 = vmatpush2.bf16.msra.mxu0 0
        %538 = vmatprep.subr.bf16.mxu0 0
        %539 = vmatpush2.bf16.msra.mxu0 0
        %540 = vmatprep.mubr.bf16.mxu0 0
        %541 = vmatmul.mubr.bf16.gmra.mxu0 %v435
        %v542 = vpop.f32.mrf.mxu0
        %v543 = vadd.f32 %v458, %v542
        %v544 = vpop.f32.mrf.mxu0
        %v545 = vpop.f32.mrf.mxu0
        %v546 = vadd.f32 %v458, %v545
        %v547 = vpop.f32.mrf.mxu0
        %548 = vmatprep.mubr.bf16.mxu0 0
        %549 = vmatmul.mubr.bf16.gmra.mxu0 %v430
        %v550 = vpop.f32.mrf.mxu0
        %v551 = vadd.f32 %v458, %v550
        %v552 = vpop.f32.mrf.mxu0
        %v553 = vpop.f32.mrf.mxu0
        %v554 = vpop.f32.mrf.mxu0
        %555 = vdwg.mxu0
        %v556 = vmax.f32 %v543, 0.0
        %v557 = vmax.f32 %v546, 0.0
        %v558 = vmax.f32 %v551, 0.0
        %p559 = scmp.gt.s32.totalorder %s34, 0
        %s560 = scalar_select %p559, 1, 0
        %s561 = scvt.s32.f32 %s560
        %s562 = sadd.s32 %s34, 1
        %s563 = smul.u32 %s562, 16
        %p564 = scmp.lt.s32.totalorder %s563, 16
        %s565 = scalar_select %p564, 1, 0
        %s566 = scvt.s32.f32 %s565
        %v567 = vpack.c.bf16 %v557, %v556
        %v568 = vstv %s561
        %v569 = vmul.f32 %v558, %v568
        %v570 = vpack.c.bf16 %v569, %v569
        %v571 = vstv %s566
        %v572 = vmul.f32 %v558, %v571
        %v573 = vpack.c.bf16 %v572, %v572
        %v575 = vshrl.u32 %v567, 16
        %v577 = vrot.slane %v575, 7
        %v578 = vshll.u32 %v567, 16
        %v580 = vor.u32 %v577, %v578
        %vm582 = vcmask 1040384
        %vm583 = vsmask.f32 256
        %vm584 = vmand %vm582, %vm583
        %v585 = vsel %vm584, %v570, %v580
        %v586 = vrot.slane %v578, 1
        %v587 = vor.u32 %v575, %v586
        %v590 = vrot.slane %v573, 1
        %vm592 = vcmask 1047552
        %vm593 = vsmask.f32 7424
        %vm594 = vmand %vm592, %vm593
        %v595 = vsel %vm594, %v587, %v590
        %v596 = vld [vmem:[#allocation8] sm:$0xf]
        %v597 = vld [vmem:[#allocation8 + $0x4] sm:$0xf]
        %v598 = vld [vmem:[#allocation8 + $0x8] sm:$0xf]
        %v599 = vld [vmem:[#allocation8 + $0xc] sm:$0xf]
        %v600 = vld [vmem:[#allocation8 + $0x10] sm:$0xf]
        %v601 = vld [vmem:[#allocation8 + $0x14] sm:$0xf]
        %v602 = vld [vmem:[#allocation8 + $0x18] sm:$0xf]
        %v603 = vld [vmem:[#allocation8 + $0x1c] sm:$0xf]
        %v604 = vld [vmem:[#allocation8 + $0x20] sm:$0xf]
        %v605 = vld [vmem:[#allocation8 + $0x24] sm:$0xf]
        %v606 = vld [vmem:[#allocation8 + $0x28] sm:$0xf]
        %v607 = vld [vmem:[#allocation8 + $0x2c] sm:$0xf]
        %v608 = vld [vmem:[#allocation8 + $0x30] sm:$0xf]
        %v609 = vld [vmem:[#allocation8 + $0x34] sm:$0xf]
        %v610 = vld [vmem:[#allocation8 + $0x38] sm:$0xf]
        %v611 = vld [vmem:[#allocation8 + $0x3c] sm:$0xf]
        %v612 = vld [vmem:[#allocation8 + $0x40] sm:$0xf]
        %v613 = vld [vmem:[#allocation8 + $0x44] sm:$0xf]
        %v614 = vld [vmem:[#allocation8 + $0x48] sm:$0xf]
        %v615 = vld [vmem:[#allocation8 + $0x4c] sm:$0xf]
        %v616 = vld [vmem:[#allocation8 + $0x50] sm:$0xf]
        %v617 = vld [vmem:[#allocation8 + $0x54] sm:$0xf]
        %v618 = vld [vmem:[#allocation8 + $0x58] sm:$0xf]
        %v619 = vld [vmem:[#allocation8 + $0x5c] sm:$0xf]
        %v620 = vld [vmem:[#allocation8 + $0x60] sm:$0xf]
        %v621 = vld [vmem:[#allocation8 + $0x64] sm:$0xf]
        %v622 = vld [vmem:[#allocation8 + $0x68] sm:$0xf]
        %v623 = vld [vmem:[#allocation8 + $0x6c] sm:$0xf]
        %v624 = vld [vmem:[#allocation8 + $0x70] sm:$0xf]
        %v625 = vld [vmem:[#allocation8 + $0x74] sm:$0xf]
        %v626 = vld [vmem:[#allocation8 + $0x78] sm:$0xf]
        %v627 = vld [vmem:[#allocation8 + $0x7c] sm:$0xf]
        %v628 = vld [vmem:[#allocation8 + $0x80] sm:$0xf]
        %v629 = vld [vmem:[#allocation8 + $0x84] sm:$0xf]
        %v630 = vld [vmem:[#allocation8 + $0x88] sm:$0xf]
        %v631 = vld [vmem:[#allocation8 + $0x8c] sm:$0xf]
        %v632 = vld [vmem:[#allocation8 + $0x90] sm:$0xf]
        %v633 = vld [vmem:[#allocation8 + $0x94] sm:$0xf]
        %v634 = vld [vmem:[#allocation8 + $0x98] sm:$0xf]
        %v635 = vld [vmem:[#allocation8 + $0x9c] sm:$0xf]
        %v636 = vld [vmem:[#allocation8 + $0xa0] sm:$0xf]
        %v637 = vld [vmem:[#allocation8 + $0xa4] sm:$0xf]
        %v638 = vld [vmem:[#allocation8 + $0xa8] sm:$0xf]
        %v639 = vld [vmem:[#allocation8 + $0xac] sm:$0xf]
        %v640 = vld [vmem:[#allocation8 + $0xb0] sm:$0xf]
        %v641 = vld [vmem:[#allocation8 + $0xb4] sm:$0xf]
        %v642 = vld [vmem:[#allocation8 + $0xb8] sm:$0xf]
        %v643 = vld [vmem:[#allocation8 + $0xbc] sm:$0xf]
        %v644 = vld [vmem:[%s5] sm:$0x1]
        %v646 = vlaneseq
        %v647 = vshrl.u32 %v646, 7
        %v648 = vsub.s32 0, %v647
        %v649 = vrot.slane %v644, %v648
        %v699 = vunpack.c.l.b16 %v596
        %v700 = vunpack.c.l.b16 %v597
        %v701 = vunpack.c.l.b16 %v598
        %v702 = vunpack.c.l.b16 %v599
        %v703 = vunpack.c.l.b16 %v600
        %v704 = vunpack.c.l.b16 %v601
        %v705 = vunpack.c.l.b16 %v602
        %v706 = vunpack.c.l.b16 %v603
        %v707 = vunpack.c.l.b16 %v604
        %v708 = vunpack.c.l.b16 %v605
        %v709 = vunpack.c.l.b16 %v606
        %v710 = vunpack.c.l.b16 %v607
        %v711 = vunpack.c.l.b16 %v608
        %v712 = vunpack.c.l.b16 %v609
        %v713 = vunpack.c.l.b16 %v610
        %v714 = vunpack.c.l.b16 %v611
        %v715 = vunpack.c.l.b16 %v612
        %v716 = vunpack.c.l.b16 %v613
        %v717 = vunpack.c.l.b16 %v614
        %v718 = vunpack.c.l.b16 %v615
        %v719 = vunpack.c.l.b16 %v616
        %v720 = vunpack.c.l.b16 %v617
        %v721 = vunpack.c.l.b16 %v618
        %v722 = vunpack.c.l.b16 %v619
        %v723 = vunpack.c.l.b16 %v620
        %v724 = vunpack.c.l.b16 %v621
        %v725 = vunpack.c.l.b16 %v622
        %v726 = vunpack.c.l.b16 %v623
        %v727 = vunpack.c.l.b16 %v624
        %v728 = vunpack.c.l.b16 %v625
        %v729 = vunpack.c.l.b16 %v626
        %v730 = vunpack.c.l.b16 %v627
        %v731 = vunpack.c.l.b16 %v628
        %v732 = vunpack.c.l.b16 %v629
        %v733 = vunpack.c.l.b16 %v630
        %v734 = vunpack.c.l.b16 %v631
        %v735 = vunpack.c.l.b16 %v632
        %v736 = vunpack.c.l.b16 %v633
        %v737 = vunpack.c.l.b16 %v634
        %v738 = vunpack.c.l.b16 %v635
        %v739 = vunpack.c.l.b16 %v636
        %v740 = vunpack.c.l.b16 %v637
        %v741 = vunpack.c.l.b16 %v638
        %v742 = vunpack.c.l.b16 %v639
        %v743 = vunpack.c.l.b16 %v640
        %v744 = vunpack.c.l.b16 %v641
        %v745 = vunpack.c.l.b16 %v642
        %v746 = vunpack.c.l.b16 %v643
        %v747 = vpack.c.b16 %v700, %v699
        %v748 = vpack.c.b16 %v702, %v701
        %v749 = vpack.c.b16 %v704, %v703
        %v750 = vpack.c.b16 %v706, %v705
        %v751 = vpack.c.b16 %v708, %v707
        %v752 = vpack.c.b16 %v710, %v709
        %v753 = vpack.c.b16 %v712, %v711
        %v754 = vpack.c.b16 %v714, %v713
        %v755 = vpack.c.b16 %v716, %v715
        %v756 = vpack.c.b16 %v718, %v717
        %v757 = vpack.c.b16 %v720, %v719
        %v758 = vpack.c.b16 %v722, %v721
        %v759 = vpack.c.b16 %v724, %v723
        %v760 = vpack.c.b16 %v726, %v725
        %v761 = vpack.c.b16 %v728, %v727
        %v762 = vpack.c.b16 %v730, %v729
        %v763 = vpack.c.b16 %v732, %v731
        %v764 = vpack.c.b16 %v734, %v733
        %v765 = vpack.c.b16 %v736, %v735
        %v766 = vpack.c.b16 %v738, %v737
        %v767 = vpack.c.b16 %v740, %v739
        %v768 = vpack.c.b16 %v742, %v741
        %v769 = vpack.c.b16 %v744, %v743
        %v770 = vpack.c.b16 %v746, %v745
        %795 = vmatprep.subr.bf16.mxu0 0
        %796 = vmatpush1.bf16.msra.mxu0 %v754
        %797 = vmatprep.subr.bf16.mxu0 0
        %798 = vmatpush1.bf16.msra.mxu0 %v753
        %799 = vmatprep.subr.bf16.mxu0 0
        %800 = vmatpush1.bf16.msra.mxu0 %v752
        %801 = vmatprep.subr.bf16.mxu0 0
        %802 = vmatpush1.bf16.msra.mxu0 %v751
        %803 = vmatprep.subr.bf16.mxu0 0
        %804 = vmatpush1.bf16.msra.mxu0 %v750
        %805 = vmatprep.subr.bf16.mxu0 0
        %806 = vmatpush1.bf16.msra.mxu0 %v749
        %807 = vmatprep.subr.bf16.mxu0 0
        %808 = vmatpush1.bf16.msra.mxu0 %v748
        %809 = vmatprep.subr.bf16.mxu0 0
        %810 = vmatpush1.bf16.msra.mxu0 %v747
        %811 = vmatprep.subr.bf16.mxu0 0
        %812 = vmatpush2.bf16.msra.mxu0 %v762
        %813 = vmatprep.subr.bf16.mxu0 0
        %814 = vmatpush2.bf16.msra.mxu0 %v761
        %815 = vmatprep.subr.bf16.mxu0 0
        %816 = vmatpush2.bf16.msra.mxu0 %v760
        %817 = vmatprep.subr.bf16.mxu0 0
        %818 = vmatpush2.bf16.msra.mxu0 %v759
        %819 = vmatprep.subr.bf16.mxu0 0
        %820 = vmatpush2.bf16.msra.mxu0 %v758
        %821 = vmatprep.subr.bf16.mxu0 0
        %822 = vmatpush2.bf16.msra.mxu0 %v757
        %823 = vmatprep.subr.bf16.mxu0 0
        %824 = vmatpush2.bf16.msra.mxu0 %v756
        %825 = vmatprep.subr.bf16.mxu0 0
        %826 = vmatpush2.bf16.msra.mxu0 %v755
        %827 = vmatprep.mubr.bf16.mxu0 %v567
        %828 = vmatmul.mubr.bf16.gmra.mxu0 %v585
        %v829 = vpop.f32.mrf.mxu0
        %v830 = vadd.f32 %v649, %v829
        %v831 = vpop.f32.mrf.mxu0
        %v832 = vpop.f32.mrf.mxu0
        %v833 = vadd.f32 %v649, %v832
        %v834 = vpop.f32.mrf.mxu0
        %835 = vdwg.mxu0
        %836 = vmatprep.subr.bf16.mxu0 0
        %837 = vmatpush1.bf16.msra.mxu0 %v770
        %838 = vmatprep.subr.bf16.mxu0 0
        %839 = vmatpush1.bf16.msra.mxu0 %v769
        %840 = vmatprep.subr.bf16.mxu0 0
        %841 = vmatpush1.bf16.msra.mxu0 %v768
        %842 = vmatprep.subr.bf16.mxu0 0
        %843 = vmatpush1.bf16.msra.mxu0 %v767
        %844 = vmatprep.subr.bf16.mxu0 0
        %845 = vmatpush1.bf16.msra.mxu0 %v766
        %846 = vmatprep.subr.bf16.mxu0 0
        %847 = vmatpush1.bf16.msra.mxu0 %v765
        %848 = vmatprep.subr.bf16.mxu0 0
        %849 = vmatpush1.bf16.msra.mxu0 %v764
        %850 = vmatprep.subr.bf16.mxu0 0
        %851 = vmatpush1.bf16.msra.mxu0 %v763
        %852 = vmatprep.subr.bf16.mxu0 0
        %853 = vmatpush2.bf16.msra.mxu0 0
        %854 = vmatprep.subr.bf16.mxu0 0
        %855 = vmatpush2.bf16.msra.mxu0 0
        %856 = vmatprep.subr.bf16.mxu0 0
        %857 = vmatpush2.bf16.msra.mxu0 0
        %858 = vmatprep.subr.bf16.mxu0 0
        %859 = vmatpush2.bf16.msra.mxu0 0
        %860 = vmatprep.subr.bf16.mxu0 0
        %861 = vmatpush2.bf16.msra.mxu0 0
        %862 = vmatprep.subr.bf16.mxu0 0
        %863 = vmatpush2.bf16.msra.mxu0 0
        %864 = vmatprep.subr.bf16.mxu0 0
        %865 = vmatpush2.bf16.msra.mxu0 0
        %866 = vmatprep.subr.bf16.mxu0 0
        %867 = vmatpush2.bf16.msra.mxu0 0
        %868 = vmatprep.mubr.bf16.mxu0 0
        %869 = vmatmul.mubr.bf16.gmra.mxu0 %v595
        %v870 = vpop.f32.mrf.mxu0
        %v871 = vadd.f32 %v830, %v870
        %v872 = vpop.f32.mrf.mxu0
        %v873 = vpop.f32.mrf.mxu0
        %v874 = vadd.f32 %v833, %v873
        %v875 = vpop.f32.mrf.mxu0
        %876 = vdwg.mxu0
        %v877 = vmax.f32 %v871, 0.0
        %v878 = vmax.f32 %v874, 0.0
        %v879 = vpack.c.bf16 %v878, %v877
        %v880 = vld [vmem:[#allocation10] sm:$0xf]
        %v881 = vld [vmem:[#allocation10 + $0x4] sm:$0xf]
        %v882 = vld [vmem:[#allocation10 + $0x8] sm:$0xf]
        %v883 = vld [vmem:[#allocation10 + $0xc] sm:$0xf]
        %v884 = vld [vmem:[#allocation10 + $0x10] sm:$0xf]
        %v885 = vld [vmem:[#allocation10 + $0x14] sm:$0xf]
        %v886 = vld [vmem:[#allocation10 + $0x18] sm:$0xf]
        %v887 = vld [vmem:[#allocation10 + $0x1c] sm:$0xf]
        %v888 = vld [vmem:[#allocation10 + $0x20] sm:$0xf]
        %v889 = vld [vmem:[#allocation10 + $0x24] sm:$0xf]
        %v890 = vld [vmem:[#allocation10 + $0x28] sm:$0xf]
        %v891 = vld [vmem:[#allocation10 + $0x2c] sm:$0xf]
        %v892 = vld [vmem:[#allocation10 + $0x30] sm:$0xf]
        %v893 = vld [vmem:[#allocation10 + $0x34] sm:$0xf]
        %v894 = vld [vmem:[#allocation10 + $0x38] sm:$0xf]
        %v895 = vld [vmem:[#allocation10 + $0x3c] sm:$0xf]
        %v896 = vld [vmem:[%s7] sm:$0x1]
        %v898 = vlaneseq
        %v899 = vshrl.u32 %v898, 7
        %v900 = vsub.s32 0, %v899
        %v901 = vrot.slane %v896, %v900
        %v919 = vunpack.c.l.b16 %v880
        %v920 = vunpack.c.l.b16 %v881
        %v921 = vunpack.c.l.b16 %v882
        %v922 = vunpack.c.l.b16 %v883
        %v923 = vunpack.c.l.b16 %v884
        %v924 = vunpack.c.l.b16 %v885
        %v925 = vunpack.c.l.b16 %v886
        %v926 = vunpack.c.l.b16 %v887
        %v927 = vunpack.c.l.b16 %v888
        %v928 = vunpack.c.l.b16 %v889
        %v929 = vunpack.c.l.b16 %v890
        %v930 = vunpack.c.l.b16 %v891
        %v931 = vunpack.c.l.b16 %v892
        %v932 = vunpack.c.l.b16 %v893
        %v933 = vunpack.c.l.b16 %v894
        %v934 = vunpack.c.l.b16 %v895
        %v935 = vpack.c.b16 %v920, %v919
        %v936 = vpack.c.b16 %v922, %v921
        %v937 = vpack.c.b16 %v924, %v923
        %v938 = vpack.c.b16 %v926, %v925
        %v939 = vpack.c.b16 %v928, %v927
        %v940 = vpack.c.b16 %v930, %v929
        %v941 = vpack.c.b16 %v932, %v931
        %v942 = vpack.c.b16 %v934, %v933
        %951 = vmatprep.subr.bf16.mxu0 0
        %952 = vmatpush1.bf16.msra.mxu0 %v942
        %953 = vmatprep.subr.bf16.mxu0 0
        %954 = vmatpush1.bf16.msra.mxu0 %v941
        %955 = vmatprep.subr.bf16.mxu0 0
        %956 = vmatpush1.bf16.msra.mxu0 %v940
        %957 = vmatprep.subr.bf16.mxu0 0
        %958 = vmatpush1.bf16.msra.mxu0 %v939
        %959 = vmatprep.subr.bf16.mxu0 0
        %960 = vmatpush1.bf16.msra.mxu0 %v938
        %961 = vmatprep.subr.bf16.mxu0 0
        %962 = vmatpush1.bf16.msra.mxu0 %v937
        %963 = vmatprep.subr.bf16.mxu0 0
        %964 = vmatpush1.bf16.msra.mxu0 %v936
        %965 = vmatprep.subr.bf16.mxu0 0
        %966 = vmatpush1.bf16.msra.mxu0 %v935
        %967 = vmatprep.subr.bf16.mxu0 0
        %968 = vmatpush2.bf16.msra.mxu0 0
        %969 = vmatprep.subr.bf16.mxu0 0
        %970 = vmatpush2.bf16.msra.mxu0 0
        %971 = vmatprep.subr.bf16.mxu0 0
        %972 = vmatpush2.bf16.msra.mxu0 0
        %973 = vmatprep.subr.bf16.mxu0 0
        %974 = vmatpush2.bf16.msra.mxu0 0
        %975 = vmatprep.subr.bf16.mxu0 0
        %976 = vmatpush2.bf16.msra.mxu0 0
        %977 = vmatprep.subr.bf16.mxu0 0
        %978 = vmatpush2.bf16.msra.mxu0 0
        %979 = vmatprep.subr.bf16.mxu0 0
        %980 = vmatpush2.bf16.msra.mxu0 0
        %981 = vmatprep.subr.bf16.mxu0 0
        %982 = vmatpush2.bf16.msra.mxu0 0
        %983 = vmatprep.mubr.bf16.mxu0 0
        %984 = vmatmul.mubr.bf16.gmra.mxu0 %v879
        %v985 = vpop.f32.mrf.mxu0
        %v986 = vadd.f32 %v901, %v985
        %v987 = vpop.f32.mrf.mxu0
        %v988 = vpop.f32.mrf.mxu0
        %v989 = vadd.f32 %v901, %v988
        %v990 = vpop.f32.mrf.mxu0
        %991 = vdwg.mxu0
        %v992 = vunpack.c.l.bf16 %v428
        %v993 = vunpack.c.l.bf16 %v429
        %v994 = vadd.f32 %v986, %v992
        %v995 = vadd.f32 %v989, %v993
        %v996 = vmax.f32 %v994, 0.0
        %v997 = vmax.f32 %v995, 0.0
        %v998 = vpack.c.bf16 %v997, %v996
        %v1000 = vunpack.c.l.b16 %v998
        %v1001 = vunpack.c.h.b16 %v998
        %v1002 = vpack.c.b16 %v1000, %v1000
        %v1003 = vpack.c.b16 %v1001, %v1001
        %1006 = vst [vmem:[%s424] sm:$0xf] %v1002
        %1007 = vst [vmem:[%s424 + $0x4] sm:$0xf] %v1003
        %s1008 = sand.u32 %s233, 1
        %s1009 = scalar_lea.sflag [#allocation4], %s1008
        %s1010 = sand.u32 %s233, 1
        %s1011 = smul.addr %s1010, 8
        %s1012 = scalar_lea.vmem [#allocation11], %s1011
        // Predicated region
        $region73: #{tpu_custom_call.1} parent=51 // pred_check
          %p1013 = pneg %p243
        $region74: #{tpu_custom_call.1} parent=51 // pred_check_branch
          %1015 = sbr.rel (%p1013) target = $region76
        $region75: #{tpu_custom_call.1} parent=51 // pred_region
          %s1016 = smul.u32 2, %s34
          %s1018 = ssub.s32 128, 128
          %1019 = vsyncadd %s1009, %s1018
          %s1020 = smul.addr %s33, 2
          %s1021 = sadd.s32 %s1016, %s1020
          %s1022 = smul.addr %s1021, 64
          %s1023 = scalar_lea.hbm %s8, %s1022
          %s1024 = sshll.u32 %s1012, 4
          %s1025 = int_to_ptr.vmem [resolvable:$true] %s1024
          %1030 = dma.vmem_to_hbm [thread:$0]  %s1025, 128, %s1023, %s1009, 64, 64, 4
        $region76: #{tpu_custom_call.1} parent=51 // pred_fallthru
          _
      $region52: #{tpu_custom_call.1} parent=5 // pred_fallthru
        _
      %p1031 = scmp.le.s32.totalorder 2, %s24
      // Predicated region
      $region77: #{tpu_custom_call.1} parent=5 // pred_check
        %p1032 = pneg %p1031
      $region78: #{tpu_custom_call.1} parent=5 // pred_check_branch
        %1034 = sbr.rel (%p1032) target = $region80
      $region79: #{tpu_custom_call.1} parent=5 // pred_region
        %s1035 = ssub.s32 %s24, 2
        // Predicated region
        $region81: #{tpu_custom_call.1} parent=79 // pred_check
          %p1036 = pneg %p249
        $region82: #{tpu_custom_call.1} parent=79 // pred_check_branch
          %1038 = sbr.rel (%p1036) target = $region84
        $region83: #{tpu_custom_call.1} parent=79 // pred_region
          %s1039 = sand.u32 %s234, 1
          %s1040 = scalar_lea.sflag [#allocation4], %s1039
          %s1041 = sand.u32 %s234, 1
          %s1042 = smul.addr %s1041, 8
          %s1043 = scalar_lea.vmem [#allocation11], %s1042
          %1044 = dma.done %s1040, 128
        $region84: #{tpu_custom_call.1} parent=79 // pred_fallthru
          _
      $region80: #{tpu_custom_call.1} parent=5 // pred_fallthru
        _
    $region6: #{tpu_custom_call.1} parent=1 // loop_footer
      %s28 = sadd.s32 1, %s24
    $region7: #{tpu_custom_call.1} parent=1 // loop_footer_branch
      %23 = sbr.rel target = $region3
    $region8: #{tpu_custom_call.1} parent=1 // loop_exit
      _
    %1045 = vsyncpa [#allocation3], 1
    %s1046 = scalar_lea.sflag [#allocation3], 1
    %1047 = vsyncpa %s1046, 1
    %1048 = vsyncpa [#allocation6], 1
    %s1049 = scalar_lea.sflag [#allocation6], 1
    %1050 = vsyncpa %s1049, 1
    %1051 = vsyncpa [#allocation9], 1
    %1052 = vsyncpa [#allocation4], 1
    %s1053 = scalar_lea.sflag [#allocation4], 1
    %1054 = vsyncpa %s1053, 1

// kernel: tpu_custom_call.1
$region0: #{tpu_custom_call.1}
  #allocation0 [shape = 'u32[]', space=smem, size = 0x4, offset = 0x4, fixed_abs, tag = 'smem constant byte address 0x4 - core index']
  #allocation1 [shape = 'u32[144,128]{1,0:T(1,128)}', space=vmem, size = 0x12000, scoped, tag = 'internal scratch']
  %s0 = inlined_call_operand.hbm [shape: bf16[2,16,128], index: 0, kind: input, shape index: {}]
  %s1 = inlined_call_operand.hbm [shape: bf16[2,1,8,128], index: 1, kind: input, shape index: {}]
  %s2 = inlined_call_operand.hbm [shape: bf16[128,128], index: 2, kind: input, shape index: {}]
  %s3 = inlined_call_operand.vmem [shape: f32[1,128], index: 3, kind: input, shape index: {}]
  %s4 = inlined_call_operand.hbm [shape: bf16[384,128], index: 4, kind: input, shape index: {}]
  %s5 = inlined_call_operand.vmem [shape: f32[1,128], index: 5, kind: input, shape index: {}]
  %s6 = inlined_call_operand.hbm [shape: bf16[128,128], index: 6, kind: input, shape index: {}]
  %s7 = inlined_call_operand.vmem [shape: f32[1,128], index: 7, kind: input, shape index: {}]
  %s8 = inlined_call_operand.hbm [shape: bf16[2,16,128], index: 8, kind: output, shape index: {}]
  %s9 = sld [smem:[#allocation0]]
  $region85: #{tpu_custom_call.1} parent=0
    _
  %s11 = ssub.s32 1, %s9
  %s12 = scalar_select 0, %s11, %s9
  $region1: #{tpu_custom_call.1} parent=0
    #allocation2 [shape = 'u8[8192]{0}', space=vmem, size = 0x2000, scoped, tag = 'input window, operand 0']
    #allocation3 [shape = 's32[2]{0}', space=sflag, size = 0x8, scoped, tag = 'scoped memory for tpu_custom_call.1']
    #allocation4 [shape = 's32[2]{0}', space=sflag, size = 0x8, scoped, tag = 'scoped memory for tpu_custom_call.1']
    #allocation5 [shape = 'u8[4096]{0}', space=vmem, size = 0x1000, scoped, tag = 'input window, operand 1']
    #allocation6 [shape = 's32[2]{0}', space=sflag, size = 0x8, scoped, tag = 'scoped memory for tpu_custom_call.1']
    #allocation7 [shape = 'u8[32768]{0}', space=vmem, size = 0x8000, scoped, tag = 'input window, operand 2, single buffered']
    #allocation8 [shape = 'u8[98304]{0}', space=vmem, size = 0x18000, scoped, tag = 'input window, operand 4, single buffered']
    #allocation9 [shape = 's32[1]{0}', space=sflag, size = 0x4, scoped, tag = 'scoped memory for tpu_custom_call.1']
    #allocation10 [shape = 'u8[32768]{0}', space=vmem, size = 0x8000, scoped, tag = 'input window, operand 6, single buffered']
    #allocation11 [shape = 'u8[8192]{0}', space=vmem, size = 0x2000, scoped, tag = 'output window, operand 0']
    %13 = vsyncpa [#allocation3], 0
    %s14 = scalar_lea.sflag [#allocation3], 1
    %15 = vsyncpa %s14, 0
    %16 = vsyncpa [#allocation6], 0
    %s17 = scalar_lea.sflag [#allocation6], 1
    %18 = vsyncpa %s17, 0
    %19 = vsyncpa [#allocation9], 0
    %20 = vsyncpa [#allocation4], 0
    %s21 = scalar_lea.sflag [#allocation4], 1
    %22 = vsyncpa %s21, 0
    loop: start=0, step=1, limit=4
    $region2: #{tpu_custom_call.1} parent=1 // loop_pre_header
      _
    $region3: #{tpu_custom_call.1} parent=1 // loop_header
      %s24 = sphi 0, %s28
      %p25 = scmp.ge.s32.totalorder %s24, 4
      %s31 = sphi 0, %s43
      %s32 = sphi 0, %s39
      %s33 = sphi 0, %s31
      %s34 = sphi 0, %s32
      %s35 = sphi 0, %s33
      %s36 = sphi 0, %s34
      %s48 = sphi 0, %s50
      %s51 = sphi 0, %s48
      %s52 = sphi 0, %s51
      %s68 = sphi 0, %s52
      %s76 = sphi 0, %s78
      %s79 = sphi 0, %s76
      %s80 = sphi 0, %s79
      %s96 = sphi 0, %s80
      %s100 = sphi 0, %s100
      %s102 = sphi 0, %s100
      %s103 = sphi 0, %s102
      %s117 = sphi 0, %s103
      %s121 = sphi 0, %s121
      %s123 = sphi 0, %s121
      %s124 = sphi 0, %s123
      %s138 = sphi 0, %s124
      %s142 = sphi 0, %s142
      %s144 = sphi 0, %s142
      %s145 = sphi 0, %s144
      %s159 = sphi 0, %s145
      %s163 = sphi 0, %s163
      %s165 = sphi 0, %s163
      %s166 = sphi 0, %s165
      %s180 = sphi 0, %s166
      %s184 = sphi 0, %s184
      %s186 = sphi 0, %s184
      %s187 = sphi 0, %s186
      %s201 = sphi 0, %s187
      %s205 = sphi 0, %s205
      %s207 = sphi 0, %s205
      %s208 = sphi 0, %s207
      %s222 = sphi 0, %s208
      %s230 = sphi 0, %s232
      %s233 = sphi 0, %s230
      %s234 = sphi 0, %s233
      %s250 = sphi 0, %s234
    $region4: #{tpu_custom_call.1} parent=1 // loop_header_branch
      %27 = sbr.rel (%p25) target = $region8
    $region5: #{tpu_custom_call.1} parent=1 // loop_body
      %s29 = ssub.s32 %s24, 1
      %s30 = ssub.s32 %s24, 2
      %s37 = sadd.s32 1, %s32
      %p38 = scmp.ge.s32.totalorder %s37, 1
      %s39 = scalar_select %p38, 0, %s37
      %s40 = sadd.s32 1, %s31
      %s41 = scalar_select %p38, %s40, %s31
      %p42 = scmp.ge.s32.totalorder %s41, 2
      %s43 = scalar_select %p42, 0, %s41
      %s44 = ssub.s32 %s31, %s43
      %s45 = ssub.s32 %s32, %s39
      %s46 = sor.u32 %s44, %s45
      %p47 = scmp.eq.s32.totalorder %s46, 0
      %s49 = sadd.s32 %s48, 1
      %s50 = scalar_select %p47, %s48, %s49
      %p53 = pneg %p47
      %p54 = scmp.eq.s32.totalorder %s24, 1
      %p55 = por %p53, %p54
      %p56 = scmp.ne.s32.totalorder %s48, %s51
      %p57 = scmp.eq.s32.totalorder %s24, 0
      %p58 = por %p56, %p57
      %p59 = scmp.ne.s32.totalorder %s48, %s51
      %p60 = scmp.eq.s32.totalorder %s29, 1
      %p61 = por %p59, %p60
      %p62 = scmp.ne.s32.totalorder %s51, %s52
      %p63 = scmp.eq.s32.totalorder %s29, 0
      %p64 = por %p62, %p63
      %p65 = scmp.ne.s32.totalorder %s51, %s52
      %p66 = scmp.eq.s32.totalorder %s30, 1
      %p67 = por %p65, %p66
      %p69 = scmp.ne.s32.totalorder %s52, %s68
      %p70 = scmp.eq.s32.totalorder %s30, 0
      %p71 = por %p69, %p70
      %s72 = ssub.s32 %s31, %s43
      %s73 = ssub.s32 %s32, %s39
      %s74 = sor.u32 %s72, %s73
      %p75 = scmp.eq.s32.totalorder %s74, 0
      %s77 = sadd.s32 %s76, 1
      %s78 = scalar_select %p75, %s76, %s77
      %p81 = pneg %p75
      %p82 = scmp.eq.s32.totalorder %s24, 1
      %p83 = por %p81, %p82
      %p84 = scmp.ne.s32.totalorder %s76, %s79
      %p85 = scmp.eq.s32.totalorder %s24, 0
      %p86 = por %p84, %p85
      %p87 = scmp.ne.s32.totalorder %s76, %s79
      %p88 = scmp.eq.s32.totalorder %s29, 1
      %p89 = por %p87, %p88
      %p90 = scmp.ne.s32.totalorder %s79, %s80
      %p91 = scmp.eq.s32.totalorder %s29, 0
      %p92 = por %p90, %p91
      %p93 = scmp.ne.s32.totalorder %s79, %s80
      %p94 = scmp.eq.s32.totalorder %s30, 1
      %p95 = por %p93, %p94
      %p97 = scmp.ne.s32.totalorder %s80, %s96
      %p98 = scmp.eq.s32.totalorder %s30, 0
      %p99 = por %p97, %p98
      %s101 = sadd.s32 %s100, 1
      %p104 = scmp.eq.s32.totalorder %s24, 1
      %p105 = scmp.ne.s32.totalorder %s100, %s102
      %p106 = scmp.eq.s32.totalorder %s24, 0
      %p107 = por %p105, %p106
      %p108 = scmp.ne.s32.totalorder %s100, %s102
      %p109 = scmp.eq.s32.totalorder %s29, 1
      %p110 = por %p108, %p109
      %p111 = scmp.ne.s32.totalorder %s102, %s103
      %p112 = scmp.eq.s32.totalorder %s29, 0
      %p113 = por %p111, %p112
      %p114 = scmp.ne.s32.totalorder %s102, %s103
      %p115 = scmp.eq.s32.totalorder %s30, 1
      %p116 = por %p114, %p115
      %p118 = scmp.ne.s32.totalorder %s103, %s117
      %p119 = scmp.eq.s32.totalorder %s30, 0
      %p120 = por %p118, %p119
      %s122 = sadd.s32 %s121, 1
      %p125 = scmp.eq.s32.totalorder %s24, 1
      %p126 = scmp.ne.s32.totalorder %s121, %s123
      %p127 = scmp.eq.s32.totalorder %s24, 0
      %p128 = por %p126, %p127
      %p129 = scmp.ne.s32.totalorder %s121, %s123
      %p130 = scmp.eq.s32.totalorder %s29, 1
      %p131 = por %p129, %p130
      %p132 = scmp.ne.s32.totalorder %s123, %s124
      %p133 = scmp.eq.s32.totalorder %s29, 0
      %p134 = por %p132, %p133
      %p135 = scmp.ne.s32.totalorder %s123, %s124
      %p136 = scmp.eq.s32.totalorder %s30, 1
      %p137 = por %p135, %p136
      %p139 = scmp.ne.s32.totalorder %s124, %s138
      %p140 = scmp.eq.s32.totalorder %s30, 0
      %p141 = por %p139, %p140
      %s143 = sadd.s32 %s142, 1
      %p146 = scmp.eq.s32.totalorder %s24, 1
      %p147 = scmp.ne.s32.totalorder %s142, %s144
      %p148 = scmp.eq.s32.totalorder %s24, 0
      %p149 = por %p147, %p148
      %p150 = scmp.ne.s32.totalorder %s142, %s144
      %p151 = scmp.eq.s32.totalorder %s29, 1
      %p152 = por %p150, %p151
      %p153 = scmp.ne.s32.totalorder %s144, %s145
      %p154 = scmp.eq.s32.totalorder %s29, 0
      %p155 = por %p153, %p154
      %p156 = scmp.ne.s32.totalorder %s144, %s145
      %p157 = scmp.eq.s32.totalorder %s30, 1
      %p158 = por %p156, %p157
      %p160 = scmp.ne.s32.totalorder %s145, %s159
      %p161 = scmp.eq.s32.totalorder %s30, 0
      %p162 = por %p160, %p161
      %s164 = sadd.s32 %s163, 1
      %p167 = scmp.eq.s32.totalorder %s24, 1
      %p168 = scmp.ne.s32.totalorder %s163, %s165
      %p169 = scmp.eq.s32.totalorder %s24, 0
      %p170 = por %p168, %p169
      %p171 = scmp.ne.s32.totalorder %s163, %s165
      %p172 = scmp.eq.s32.totalorder %s29, 1
      %p173 = por %p171, %p172
      %p174 = scmp.ne.s32.totalorder %s165, %s166
      %p175 = scmp.eq.s32.totalorder %s29, 0
      %p176 = por %p174, %p175
      %p177 = scmp.ne.s32.totalorder %s165, %s166
      %p178 = scmp.eq.s32.totalorder %s30, 1
      %p179 = por %p177, %p178
      %p181 = scmp.ne.s32.totalorder %s166, %s180
      %p182 = scmp.eq.s32.totalorder %s30, 0
      %p183 = por %p181, %p182
      %s185 = sadd.s32 %s184, 1
      %p188 = scmp.eq.s32.totalorder %s24, 1
      %p189 = scmp.ne.s32.totalorder %s184, %s186
      %p190 = scmp.eq.s32.totalorder %s24, 0
      %p191 = por %p189, %p190
      %p192 = scmp.ne.s32.totalorder %s184, %s186
      %p193 = scmp.eq.s32.totalorder %s29, 1
      %p194 = por %p192, %p193
      %p195 = scmp.ne.s32.totalorder %s186, %s187
      %p196 = scmp.eq.s32.totalorder %s29, 0
      %p197 = por %p195, %p196
      %p198 = scmp.ne.s32.totalorder %s186, %s187
      %p199 = scmp.eq.s32.totalorder %s30, 1
      %p200 = por %p198, %p199
      %p202 = scmp.ne.s32.totalorder %s187, %s201
      %p203 = scmp.eq.s32.totalorder %s30, 0
      %p204 = por %p202, %p203
      %s206 = sadd.s32 %s205, 1
      %p209 = scmp.eq.s32.totalorder %s24, 1
      %p210 = scmp.ne.s32.totalorder %s205, %s207
      %p211 = scmp.eq.s32.totalorder %s24, 0
      %p212 = por %p210, %p211
      %p213 = scmp.ne.s32.totalorder %s205, %s207
      %p214 = scmp.eq.s32.totalorder %s29, 1
      %p215 = por %p213, %p214
      %p216 = scmp.ne.s32.totalorder %s207, %s208
      %p217 = scmp.eq.s32.totalorder %s29, 0
      %p218 = por %p216, %p217
      %p219 = scmp.ne.s32.totalorder %s207, %s208
      %p220 = scmp.eq.s32.totalorder %s30, 1
      %p221 = por %p219, %p220
      %p223 = scmp.ne.s32.totalorder %s208, %s222
      %p224 = scmp.eq.s32.totalorder %s30, 0
      %p225 = por %p223, %p224
      %s226 = ssub.s32 %s31, %s43
      %s227 = ssub.s32 %s32, %s39
      %s228 = sor.u32 %s226, %s227
      %p229 = scmp.eq.s32.totalorder %s228, 0
      %s231 = sadd.s32 %s230, 1
      %s232 = scalar_select %p229, %s230, %s231
      %p235 = pneg %p229
      %p236 = scmp.eq.s32.totalorder %s24, 1
      %p237 = por %p235, %p236
      %p238 = scmp.ne.s32.totalorder %s230, %s233
      %p239 = scmp.eq.s32.totalorder %s24, 0
      %p240 = por %p238, %p239
      %p241 = scmp.ne.s32.totalorder %s230, %s233
      %p242 = scmp.eq.s32.totalorder %s29, 1
      %p243 = por %p241, %p242
      %p244 = scmp.ne.s32.totalorder %s233, %s234
      %p245 = scmp.eq.s32.totalorder %s29, 0
      %p246 = por %p244, %p245
      %p247 = scmp.ne.s32.totalorder %s233, %s234
      %p248 = scmp.eq.s32.totalorder %s30, 1
      %p249 = por %p247, %p248
      %p251 = scmp.ne.s32.totalorder %s234, %s250
      %p252 = scmp.eq.s32.totalorder %s30, 0
      %p253 = por %p251, %p252
      %p254 = scmp.le.s32.totalorder 1, %s24
      %p255 = scmp.lt.s32.totalorder %s24, 3
      %p256 = pnand %p254, %p255
      %p257 = pneg %p256
      // Predicated region
      $region9: #{tpu_custom_call.1} parent=5 // pred_check
        _
      $region10: #{tpu_custom_call.1} parent=5 // pred_check_branch
        %259 = sbr.rel (%p256) target = $region12
      $region11: #{tpu_custom_call.1} parent=5 // pred_region
        %s260 = ssub.s32 %s24, 1
        // Predicated region
        $region13: #{tpu_custom_call.1} parent=11 // pred_check
          %p261 = pneg %p113
        $region14: #{tpu_custom_call.1} parent=11 // pred_check_branch
          %263 = sbr.rel (%p261) target = $region16
        $region15: #{tpu_custom_call.1} parent=11 // pred_region
          %s265 = ssub.s32 1024, 1024
          %266 = vsyncadd [#allocation6], %s265
          %s267 = sshll.u32 [#allocation7], 4
          %s268 = int_to_ptr.vmem [resolvable:$true] %s267
          %273 = dma.hbm_to_vmem [thread:$0]  %s2, 1024, %s268, [#allocation6], 64, 64, 4
        $region16: #{tpu_custom_call.1} parent=11 // pred_fallthru
          _
        // Predicated region
        $region17: #{tpu_custom_call.1} parent=11 // pred_check
          %p274 = pneg %p134
        $region18: #{tpu_custom_call.1} parent=11 // pred_check_branch
          %276 = sbr.rel (%p274) target = $region20
        $region19: #{tpu_custom_call.1} parent=11 // pred_region
          _
        $region20: #{tpu_custom_call.1} parent=11 // pred_fallthru
          _
        // Predicated region
        $region21: #{tpu_custom_call.1} parent=11 // pred_check
          %p277 = pneg %p155
        $region22: #{tpu_custom_call.1} parent=11 // pred_check_branch
          %279 = sbr.rel (%p277) target = $region24
        $region23: #{tpu_custom_call.1} parent=11 // pred_region
          %s281 = ssub.s32 3072, 3072
          %282 = vsyncadd [#allocation9], %s281
          %s283 = sshll.u32 [#allocation8], 4
          %s284 = int_to_ptr.vmem [resolvable:$true] %s283
          %289 = dma.hbm_to_vmem [thread:$0]  %s4, 3072, %s284, [#allocation9], 64, 64, 4
        $region24: #{tpu_custom_call.1} parent=11 // pred_fallthru
          _
        // Predicated region
        $region25: #{tpu_custom_call.1} parent=11 // pred_check
          %p290 = pneg %p176
        $region26: #{tpu_custom_call.1} parent=11 // pred_check_branch
          %292 = sbr.rel (%p290) target = $region28
        $region27: #{tpu_custom_call.1} parent=11 // pred_region
          _
        $region28: #{tpu_custom_call.1} parent=11 // pred_fallthru
          _
        // Predicated region
        $region29: #{tpu_custom_call.1} parent=11 // pred_check
          %p293 = pneg %p197
        $region30: #{tpu_custom_call.1} parent=11 // pred_check_branch
          %295 = sbr.rel (%p293) target = $region32
        $region31: #{tpu_custom_call.1} parent=11 // pred_region
          %s297 = ssub.s32 1024, 1024
          %298 = vsyncadd [#allocation9], %s297
          %s299 = sshll.u32 [#allocation10], 4
          %s300 = int_to_ptr.vmem [resolvable:$true] %s299
          %305 = dma.hbm_to_vmem [thread:$0]  %s6, 1024, %s300, [#allocation9], 64, 64, 4
        $region32: #{tpu_custom_call.1} parent=11 // pred_fallthru
          _
        // Predicated region
        $region33: #{tpu_custom_call.1} parent=11 // pred_check
          %p306 = pneg %p218
        $region34: #{tpu_custom_call.1} parent=11 // pred_check_branch
          %308 = sbr.rel (%p306) target = $region36
        $region35: #{tpu_custom_call.1} parent=11 // pred_region
          _
        $region36: #{tpu_custom_call.1} parent=11 // pred_fallthru
          _
      $region12: #{tpu_custom_call.1} parent=5 // pred_fallthru
        _
      %p309 = scmp.lt.s32.totalorder %s24, 2
      // Predicated region
      $region37: #{tpu_custom_call.1} parent=5 // pred_check
        %p310 = pneg %p309
      $region38: #{tpu_custom_call.1} parent=5 // pred_check_branch
        %312 = sbr.rel (%p310) target = $region40
      $region39: #{tpu_custom_call.1} parent=5 // pred_region
        // Predicated region
        $region41: #{tpu_custom_call.1} parent=39 // pred_check
          %p313 = pneg %p58
        $region42: #{tpu_custom_call.1} parent=39 // pred_check_branch
          %315 = sbr.rel (%p313) target = $region44
        $region43: #{tpu_custom_call.1} parent=39 // pred_region
          %s316 = sand.u32 %s48, 1
          %s317 = scalar_lea.sflag [#allocation3], %s316
          %s318 = sand.u32 %s48, 1
          %s319 = smul.addr %s318, 8
          %s320 = scalar_lea.vmem [#allocation2], %s319
          %s321 = smul.u32 2, %s32
          %s323 = ssub.s32 128, 128
          %324 = vsyncadd %s317, %s323
          %s325 = smul.addr %s31, 2
          %s326 = sadd.s32 %s321, %s325
          %s327 = smul.addr %s326, 64
          %s328 = scalar_lea.hbm %s0, %s327
          %s329 = sshll.u32 %s320, 4
          %s330 = int_to_ptr.vmem [resolvable:$true] %s329
          %335 = dma.hbm_to_vmem [thread:$0]  %s328, 128, %s330, %s317, 64, 64, 4
        $region44: #{tpu_custom_call.1} parent=39 // pred_fallthru
          _
        // Predicated region
        $region45: #{tpu_custom_call.1} parent=39 // pred_check
          %p336 = pneg %p86
        $region46: #{tpu_custom_call.1} parent=39 // pred_check_branch
          %338 = sbr.rel (%p336) target = $region48
        $region47: #{tpu_custom_call.1} parent=39 // pred_region
          %s339 = sand.u32 %s24, 1
          %s340 = scalar_lea.sflag [#allocation6], %s339
          %s341 = sand.u32 %s76, 1
          %s342 = smul.addr %s341, 4
          %s343 = scalar_lea.vmem [#allocation5], %s342
          %s345 = ssub.s32 64, 64
          %346 = vsyncadd %s340, %s345
          %s347 = sadd.s32 %s32, %s31
          %s348 = smul.addr %s347, 64
          %s349 = scalar_lea.hbm %s1, %s348
          %s351 = sshll.u32 %s343, 4
          %s352 = int_to_ptr.vmem [resolvable:$true] %s351
          %354 = dma.hbm_to_vmem [thread:$0]  %s349, 64, %s352, %s340
        $region48: #{tpu_custom_call.1} parent=39 // pred_fallthru
          _
      $region40: #{tpu_custom_call.1} parent=5 // pred_fallthru
        _
      %p355 = scmp.le.s32.totalorder 1, %s24
      %p356 = scmp.lt.s32.totalorder %s24, 3
      %p357 = pnand %p355, %p356
      %p358 = pneg %p357
      // Predicated region
      $region49: #{tpu_custom_call.1} parent=5 // pred_check
        _
      $region50: #{tpu_custom_call.1} parent=5 // pred_check_branch
        %360 = sbr.rel (%p357) target = $region52
      $region51: #{tpu_custom_call.1} parent=5 // pred_region
        %s361 = ssub.s32 %s24, 1
        %s362 = sand.u32 %s51, 1
        %s363 = scalar_lea.sflag [#allocation3], %s362
        %s364 = sand.u32 %s51, 1
        %s365 = smul.addr %s364, 8
        %s366 = scalar_lea.vmem [#allocation2], %s365
        // Predicated region
        $region53: #{tpu_custom_call.1} parent=51 // pred_check
          %p367 = pneg %p64
        $region54: #{tpu_custom_call.1} parent=51 // pred_check_branch
          %369 = sbr.rel (%p367) target = $region56
        $region55: #{tpu_custom_call.1} parent=51 // pred_region
          %370 = dma.done %s363, 128
        $region56: #{tpu_custom_call.1} parent=51 // pred_fallthru
          _
        %s371 = sand.u32 %s29, 1
        %s372 = scalar_lea.sflag [#allocation6], %s371
        %s373 = sand.u32 %s79, 1
        %s374 = smul.addr %s373, 4
        %s375 = scalar_lea.vmem [#allocation5], %s374
        // Predicated region
        $region57: #{tpu_custom_call.1} parent=51 // pred_check
          %p376 = pneg %p92
        $region58: #{tpu_custom_call.1} parent=51 // pred_check_branch
          %378 = sbr.rel (%p376) target = $region60
        $region59: #{tpu_custom_call.1} parent=51 // pred_region
          %379 = dma.done %s372, 64
        $region60: #{tpu_custom_call.1} parent=51 // pred_fallthru
          _
        // Predicated region
        $region61: #{tpu_custom_call.1} parent=51 // pred_check
          %p380 = pneg %p113
        $region62: #{tpu_custom_call.1} parent=51 // pred_check_branch
          %382 = sbr.rel (%p380) target = $region64
        $region63: #{tpu_custom_call.1} parent=51 // pred_region
          %383 = dma.done [#allocation6], 1024
        $region64: #{tpu_custom_call.1} parent=51 // pred_fallthru
          _
        // Predicated region
        $region65: #{tpu_custom_call.1} parent=51 // pred_check
          %p384 = pneg %p155
        $region66: #{tpu_custom_call.1} parent=51 // pred_check_branch
          %386 = sbr.rel (%p384) target = $region68
        $region67: #{tpu_custom_call.1} parent=51 // pred_region
          %387 = dma.done [#allocation9], 3072
        $region68: #{tpu_custom_call.1} parent=51 // pred_fallthru
          _
        // Predicated region
        $region69: #{tpu_custom_call.1} parent=51 // pred_check
          %p388 = pneg %p197
        $region70: #{tpu_custom_call.1} parent=51 // pred_check_branch
          %390 = sbr.rel (%p388) target = $region72
        $region71: #{tpu_custom_call.1} parent=51 // pred_region
          %391 = dma.done [#allocation9], 1024
        $region72: #{tpu_custom_call.1} parent=51 // pred_fallthru
          _
        %s392 = sand.u32 %s51, 1
        %s393 = scalar_lea.sflag [#allocation3], %s392
        %s394 = sand.u32 %s51, 1
        %s395 = smul.addr %s394, 8
        %s396 = scalar_lea.vmem [#allocation2], %s395
        %p397 = pneg %p64
        %p398 = pneg %p61
        %s399 = sand.u32 %s29, 1
        %s400 = scalar_lea.sflag [#allocation6], %s399
        %s401 = sand.u32 %s79, 1
        %s402 = smul.addr %s401, 4
        %s403 = scalar_lea.vmem [#allocation5], %s402
        %p404 = pneg %p92
        %p405 = pneg %p89
        %p406 = pneg %p113
        %p407 = pneg %p110
        %p408 = pneg %p134
        %p409 = pneg %p131
        %p410 = pneg %p155
        %p411 = pneg %p152
        %p412 = pneg %p176
        %p413 = pneg %p173
        %p414 = pneg %p197
        %p415 = pneg %p194
        %p416 = pneg %p218
        %p417 = pneg %p215
        %p418 = pneg %p246
        %p419 = pneg %p243
        %s420 = sand.u32 %s233, 1
        %s421 = scalar_lea.sflag [#allocation4], %s420
        %s422 = sand.u32 %s233, 1
        %s423 = smul.addr %s422, 8
        %s424 = scalar_lea.vmem [#allocation11], %s423
        %s425 = smul.u32 2, %s34
        %s426 = smul.u32 2, %s34
        %v428 = vld [vmem:[%s366] sm:$0xf]
        %v429 = vld [vmem:[%s366 + $0x4] sm:$0xf]
        %v430 = vld [vmem:[%s375] sm:$0xf]
        %v433 = vunpack.c.l.b16 %v428
        %v434 = vunpack.c.l.b16 %v429
        %v435 = vpack.c.b16 %v434, %v433
        %v437 = vld [vmem:[#allocation7] sm:$0xf]
        %v438 = vld [vmem:[#allocation7 + $0x4] sm:$0xf]
        %v439 = vld [vmem:[#allocation7 + $0x8] sm:$0xf]
        %v440 = vld [vmem:[#allocation7 + $0xc] sm:$0xf]
        %v441 = vld [vmem:[#allocation7 + $0x10] sm:$0xf]
        %v442 = vld [vmem:[#allocation7 + $0x14] sm:$0xf]
        %v443 = vld [vmem:[#allocation7 + $0x18] sm:$0xf]
        %v444 = vld [vmem:[#allocation7 + $0x1c] sm:$0xf]
        %v445 = vld [vmem:[#allocation7 + $0x20] sm:$0xf]
        %v446 = vld [vmem:[#allocation7 + $0x24] sm:$0xf]
        %v447 = vld [vmem:[#allocation7 + $0x28] sm:$0xf]
        %v448 = vld [vmem:[#allocation7 + $0x2c] sm:$0xf]
        %v449 = vld [vmem:[#allocation7 + $0x30] sm:$0xf]
        %v450 = vld [vmem:[#allocation7 + $0x34] sm:$0xf]
        %v451 = vld [vmem:[#allocation7 + $0x38] sm:$0xf]
        %v452 = vld [vmem:[#allocation7 + $0x3c] sm:$0xf]
        %v453 = vld [vmem:[%s3] sm:$0x1]
        %v455 = vlaneseq
        %v456 = vshrl.u32 %v455, 7
        %v457 = vsub.s32 0, %v456
        %v458 = vrot.slane %v453, %v457
        %v476 = vunpack.c.l.b16 %v437
        %v477 = vunpack.c.l.b16 %v438
        %v478 = vunpack.c.l.b16 %v439
        %v479 = vunpack.c.l.b16 %v440
        %v480 = vunpack.c.l.b16 %v441
        %v481 = vunpack.c.l.b16 %v442
        %v482 = vunpack.c.l.b16 %v443
        %v483 = vunpack.c.l.b16 %v444
        %v484 = vunpack.c.l.b16 %v445
        %v485 = vunpack.c.l.b16 %v446
        %v486 = vunpack.c.l.b16 %v447
        %v487 = vunpack.c.l.b16 %v448
        %v488 = vunpack.c.l.b16 %v449
        %v489 = vunpack.c.l.b16 %v450
        %v490 = vunpack.c.l.b16 %v451
        %v491 = vunpack.c.l.b16 %v452
        %v492 = vpack.c.b16 %v477, %v476
        %v493 = vpack.c.b16 %v479, %v478
        %v494 = vpack.c.b16 %v481, %v480
        %v495 = vpack.c.b16 %v483, %v482
        %v496 = vpack.c.b16 %v485, %v484
        %v497 = vpack.c.b16 %v487, %v486
        %v498 = vpack.c.b16 %v489, %v488
        %v499 = vpack.c.b16 %v491, %v490
        %508 = vmatprep.subr.bf16.mxu0 0
        %509 = vmatpush1.bf16.msra.mxu0 %v499
        %510 = vmatprep.subr.bf16.mxu0 0
        %511 = vmatpush1.bf16.msra.mxu0 %v498
        %512 = vmatprep.subr.bf16.mxu0 0
        %513 = vmatpush1.bf16.msra.mxu0 %v497
        %514 = vmatprep.subr.bf16.mxu0 0
        %515 = vmatpush1.bf16.msra.mxu0 %v496
        %516 = vmatprep.subr.bf16.mxu0 0
        %517 = vmatpush1.bf16.msra.mxu0 %v495
        %518 = vmatprep.subr.bf16.mxu0 0
        %519 = vmatpush1.bf16.msra.mxu0 %v494
        %520 = vmatprep.subr.bf16.mxu0 0
        %521 = vmatpush1.bf16.msra.mxu0 %v493
        %522 = vmatprep.subr.bf16.mxu0 0
        %523 = vmatpush1.bf16.msra.mxu0 %v492
        %524 = vmatprep.subr.bf16.mxu0 0
        %525 = vmatpush2.bf16.msra.mxu0 0
        %526 = vmatprep.subr.bf16.mxu0 0
        %527 = vmatpush2.bf16.msra.mxu0 0
        %528 = vmatprep.subr.bf16.mxu0 0
        %529 = vmatpush2.bf16.msra.mxu0 0
        %530 = vmatprep.subr.bf16.mxu0 0
        %531 = vmatpush2.bf16.msra.mxu0 0
        %532 = vmatprep.subr.bf16.mxu0 0
        %533 = vmatpush2.bf16.msra.mxu0 0
        %534 = vmatprep.subr.bf16.mxu0 0
        %535 = vmatpush2.bf16.msra.mxu0 0
        %536 = vmatprep.subr.bf16.mxu0 0
        %537 = vmatpush2.bf16.msra.mxu0 0
        %538 = vmatprep.subr.bf16.mxu0 0
        %539 = vmatpush2.bf16.msra.mxu0 0
        %540 = vmatprep.mubr.bf16.mxu0 0
        %541 = vmatmul.mubr.bf16.gmra.mxu0 %v435
        %v542 = vpop.f32.mrf.mxu0
        %v543 = vadd.f32 %v458, %v542
        %v544 = vpop.f32.mrf.mxu0
        %v545 = vpop.f32.mrf.mxu0
        %v546 = vadd.f32 %v458, %v545
        %v547 = vpop.f32.mrf.mxu0
        %548 = vmatprep.mubr.bf16.mxu0 0
        %549 = vmatmul.mubr.bf16.gmra.mxu0 %v430
        %v550 = vpop.f32.mrf.mxu0
        %v551 = vadd.f32 %v458, %v550
        %v552 = vpop.f32.mrf.mxu0
        %v553 = vpop.f32.mrf.mxu0
        %v554 = vpop.f32.mrf.mxu0
        %555 = vdwg.mxu0
        %v556 = vmax.f32 %v543, 0.0
        %v557 = vmax.f32 %v546, 0.0
        %v558 = vmax.f32 %v551, 0.0
        %p559 = scmp.gt.s32.totalorder %s34, 0
        %s560 = scalar_select %p559, 1, 0
        %s561 = scvt.s32.f32 %s560
        %s562 = sadd.s32 %s34, 1
        %s563 = smul.u32 %s562, 16
        %p564 = scmp.lt.s32.totalorder %s563, 16
        %s565 = scalar_select %p564, 1, 0
        %s566 = scvt.s32.f32 %s565
        %v567 = vpack.c.bf16 %v557, %v556
        %v568 = vstv %s561
        %v569 = vmul.f32 %v558, %v568
        %v570 = vpack.c.bf16 %v569, %v569
        %v571 = vstv %s566
        %v572 = vmul.f32 %v558, %v571
        %v573 = vpack.c.bf16 %v572, %v572
        %v575 = vshrl.u32 %v567, 16
        %v577 = vrot.slane %v575, 7
        %v578 = vshll.u32 %v567, 16
        %v580 = vor.u32 %v577, %v578
        %vm582 = vcmask 1040384
        %vm583 = vsmask.f32 256
        %vm584 = vmand %vm582, %vm583
        %v585 = vsel %vm584, %v570, %v580
        %v586 = vrot.slane %v578, 1
        %v587 = vor.u32 %v575, %v586
        %v590 = vrot.slane %v573, 1
        %vm592 = vcmask 1047552
        %vm593 = vsmask.f32 7424
        %vm594 = vmand %vm592, %vm593
        %v595 = vsel %vm594, %v587, %v590
        %v596 = vld [vmem:[#allocation8] sm:$0xf]
        %v597 = vld [vmem:[#allocation8 + $0x4] sm:$0xf]
        %v598 = vld [vmem:[#allocation8 + $0x8] sm:$0xf]
        %v599 = vld [vmem:[#allocation8 + $0xc] sm:$0xf]
        %v600 = vld [vmem:[#allocation8 + $0x10] sm:$0xf]
        %v601 = vld [vmem:[#allocation8 + $0x14] sm:$0xf]
        %v602 = vld [vmem:[#allocation8 + $0x18] sm:$0xf]
        %v603 = vld [vmem:[#allocation8 + $0x1c] sm:$0xf]
        %v604 = vld [vmem:[#allocation8 + $0x20] sm:$0xf]
        %v605 = vld [vmem:[#allocation8 + $0x24] sm:$0xf]
        %v606 = vld [vmem:[#allocation8 + $0x28] sm:$0xf]
        %v607 = vld [vmem:[#allocation8 + $0x2c] sm:$0xf]
        %v608 = vld [vmem:[#allocation8 + $0x30] sm:$0xf]
        %v609 = vld [vmem:[#allocation8 + $0x34] sm:$0xf]
        %v610 = vld [vmem:[#allocation8 + $0x38] sm:$0xf]
        %v611 = vld [vmem:[#allocation8 + $0x3c] sm:$0xf]
        %v612 = vld [vmem:[#allocation8 + $0x40] sm:$0xf]
        %v613 = vld [vmem:[#allocation8 + $0x44] sm:$0xf]
        %v614 = vld [vmem:[#allocation8 + $0x48] sm:$0xf]
        %v615 = vld [vmem:[#allocation8 + $0x4c] sm:$0xf]
        %v616 = vld [vmem:[#allocation8 + $0x50] sm:$0xf]
        %v617 = vld [vmem:[#allocation8 + $0x54] sm:$0xf]
        %v618 = vld [vmem:[#allocation8 + $0x58] sm:$0xf]
        %v619 = vld [vmem:[#allocation8 + $0x5c] sm:$0xf]
        %v620 = vld [vmem:[#allocation8 + $0x60] sm:$0xf]
        %v621 = vld [vmem:[#allocation8 + $0x64] sm:$0xf]
        %v622 = vld [vmem:[#allocation8 + $0x68] sm:$0xf]
        %v623 = vld [vmem:[#allocation8 + $0x6c] sm:$0xf]
        %v624 = vld [vmem:[#allocation8 + $0x70] sm:$0xf]
        %v625 = vld [vmem:[#allocation8 + $0x74] sm:$0xf]
        %v626 = vld [vmem:[#allocation8 + $0x78] sm:$0xf]
        %v627 = vld [vmem:[#allocation8 + $0x7c] sm:$0xf]
        %v628 = vld [vmem:[#allocation8 + $0x80] sm:$0xf]
        %v629 = vld [vmem:[#allocation8 + $0x84] sm:$0xf]
        %v630 = vld [vmem:[#allocation8 + $0x88] sm:$0xf]
        %v631 = vld [vmem:[#allocation8 + $0x8c] sm:$0xf]
        %v632 = vld [vmem:[#allocation8 + $0x90] sm:$0xf]
        %v633 = vld [vmem:[#allocation8 + $0x94] sm:$0xf]
        %v634 = vld [vmem:[#allocation8 + $0x98] sm:$0xf]
        %v635 = vld [vmem:[#allocation8 + $0x9c] sm:$0xf]
        %v636 = vld [vmem:[#allocation8 + $0xa0] sm:$0xf]
        %v637 = vld [vmem:[#allocation8 + $0xa4] sm:$0xf]
        %v638 = vld [vmem:[#allocation8 + $0xa8] sm:$0xf]
        %v639 = vld [vmem:[#allocation8 + $0xac] sm:$0xf]
        %v640 = vld [vmem:[#allocation8 + $0xb0] sm:$0xf]
        %v641 = vld [vmem:[#allocation8 + $0xb4] sm:$0xf]
        %v642 = vld [vmem:[#allocation8 + $0xb8] sm:$0xf]
        %v643 = vld [vmem:[#allocation8 + $0xbc] sm:$0xf]
        %v644 = vld [vmem:[%s5] sm:$0x1]
        %v646 = vlaneseq
        %v647 = vshrl.u32 %v646, 7
        %v648 = vsub.s32 0, %v647
        %v649 = vrot.slane %v644, %v648
        %v699 = vunpack.c.l.b16 %v596
        %v700 = vunpack.c.l.b16 %v597
        %v701 = vunpack.c.l.b16 %v598
        %v702 = vunpack.c.l.b16 %v599
        %v703 = vunpack.c.l.b16 %v600
        %v704 = vunpack.c.l.b16 %v601
        %v705 = vunpack.c.l.b16 %v602
        %v706 = vunpack.c.l.b16 %v603
        %v707 = vunpack.c.l.b16 %v604
        %v708 = vunpack.c.l.b16 %v605
        %v709 = vunpack.c.l.b16 %v606
        %v710 = vunpack.c.l.b16 %v607
        %v711 = vunpack.c.l.b16 %v608
        %v712 = vunpack.c.l.b16 %v609
        %v713 = vunpack.c.l.b16 %v610
        %v714 = vunpack.c.l.b16 %v611
        %v715 = vunpack.c.l.b16 %v612
        %v716 = vunpack.c.l.b16 %v613
        %v717 = vunpack.c.l.b16 %v614
        %v718 = vunpack.c.l.b16 %v615
        %v719 = vunpack.c.l.b16 %v616
        %v720 = vunpack.c.l.b16 %v617
        %v721 = vunpack.c.l.b16 %v618
        %v722 = vunpack.c.l.b16 %v619
        %v723 = vunpack.c.l.b16 %v620
        %v724 = vunpack.c.l.b16 %v621
        %v725 = vunpack.c.l.b16 %v622
        %v726 = vunpack.c.l.b16 %v623
        %v727 = vunpack.c.l.b16 %v624
        %v728 = vunpack.c.l.b16 %v625
        %v729 = vunpack.c.l.b16 %v626
        %v730 = vunpack.c.l.b16 %v627
        %v731 = vunpack.c.l.b16 %v628
        %v732 = vunpack.c.l.b16 %v629
        %v733 = vunpack.c.l.b16 %v630
        %v734 = vunpack.c.l.b16 %v631
        %v735 = vunpack.c.l.b16 %v632
        %v736 = vunpack.c.l.b16 %v633
        %v737 = vunpack.c.l.b16 %v634
        %v738 = vunpack.c.l.b16 %v635
        %v739 = vunpack.c.l.b16 %v636
        %v740 = vunpack.c.l.b16 %v637
        %v741 = vunpack.c.l.b16 %v638
        %v742 = vunpack.c.l.b16 %v639
        %v743 = vunpack.c.l.b16 %v640
        %v744 = vunpack.c.l.b16 %v641
        %v745 = vunpack.c.l.b16 %v642
        %v746 = vunpack.c.l.b16 %v643
        %v747 = vpack.c.b16 %v700, %v699
        %v748 = vpack.c.b16 %v702, %v701
        %v749 = vpack.c.b16 %v704, %v703
        %v750 = vpack.c.b16 %v706, %v705
        %v751 = vpack.c.b16 %v708, %v707
        %v752 = vpack.c.b16 %v710, %v709
        %v753 = vpack.c.b16 %v712, %v711
        %v754 = vpack.c.b16 %v714, %v713
        %v755 = vpack.c.b16 %v716, %v715
        %v756 = vpack.c.b16 %v718, %v717
        %v757 = vpack.c.b16 %v720, %v719
        %v758 = vpack.c.b16 %v722, %v721
        %v759 = vpack.c.b16 %v724, %v723
        %v760 = vpack.c.b16 %v726, %v725
        %v761 = vpack.c.b16 %v728, %v727
        %v762 = vpack.c.b16 %v730, %v729
        %v763 = vpack.c.b16 %v732, %v731
        %v764 = vpack.c.b16 %v734, %v733
        %v765 = vpack.c.b16 %v736, %v735
        %v766 = vpack.c.b16 %v738, %v737
        %v767 = vpack.c.b16 %v740, %v739
        %v768 = vpack.c.b16 %v742, %v741
        %v769 = vpack.c.b16 %v744, %v743
        %v770 = vpack.c.b16 %v746, %v745
        %795 = vmatprep.subr.bf16.mxu0 0
        %796 = vmatpush1.bf16.msra.mxu0 %v754
        %797 = vmatprep.subr.bf16.mxu0 0
        %798 = vmatpush1.bf16.msra.mxu0 %v753
        %799 = vmatprep.subr.bf16.mxu0 0
        %800 = vmatpush1.bf16.msra.mxu0 %v752
        %801 = vmatprep.subr.bf16.mxu0 0
        %802 = vmatpush1.bf16.msra.mxu0 %v751
        %803 = vmatprep.subr.bf16.mxu0 0
        %804 = vmatpush1.bf16.msra.mxu0 %v750
        %805 = vmatprep.subr.bf16.mxu0 0
        %806 = vmatpush1.bf16.msra.mxu0 %v749
        %807 = vmatprep.subr.bf16.mxu0 0
        %808 = vmatpush1.bf16.msra.mxu0 %v748
        %809 = vmatprep.subr.bf16.mxu0 0
        %810 = vmatpush1.bf16.msra.mxu0 %v747
        %811 = vmatprep.subr.bf16.mxu0 0
        %812 = vmatpush2.bf16.msra.mxu0 %v762
        %813 = vmatprep.subr.bf16.mxu0 0
        %814 = vmatpush2.bf16.msra.mxu0 %v761
        %815 = vmatprep.subr.bf16.mxu0 0
        %816 = vmatpush2.bf16.msra.mxu0 %v760
        %817 = vmatprep.subr.bf16.mxu0 0
        %818 = vmatpush2.bf16.msra.mxu0 %v759
        %819 = vmatprep.subr.bf16.mxu0 0
        %820 = vmatpush2.bf16.msra.mxu0 %v758
        %821 = vmatprep.subr.bf16.mxu0 0
        %822 = vmatpush2.bf16.msra.mxu0 %v757
        %823 = vmatprep.subr.bf16.mxu0 0
        %824 = vmatpush2.bf16.msra.mxu0 %v756
        %825 = vmatprep.subr.bf16.mxu0 0
        %826 = vmatpush2.bf16.msra.mxu0 %v755
        %827 = vmatprep.mubr.bf16.mxu0 %v567
        %828 = vmatmul.mubr.bf16.gmra.mxu0 %v585
        %v829 = vpop.f32.mrf.mxu0
        %v830 = vadd.f32 %v649, %v829
        %v831 = vpop.f32.mrf.mxu0
        %v832 = vpop.f32.mrf.mxu0
        %v833 = vadd.f32 %v649, %v832
        %v834 = vpop.f32.mrf.mxu0
        %835 = vdwg.mxu0
        %836 = vmatprep.subr.bf16.mxu0 0
        %837 = vmatpush1.bf16.msra.mxu0 %v770
        %838 = vmatprep.subr.bf16.mxu0 0
        %839 = vmatpush1.bf16.msra.mxu0 %v769
        %840 = vmatprep.subr.bf16.mxu0 0
        %841 = vmatpush1.bf16.msra.mxu0 %v768
        %842 = vmatprep.subr.bf16.mxu0 0
        %843 = vmatpush1.bf16.msra.mxu0 %v767
        %844 = vmatprep.subr.bf16.mxu0 0
        %845 = vmatpush1.bf16.msra.mxu0 %v766
        %846 = vmatprep.subr.bf16.mxu0 0
        %847 = vmatpush1.bf16.msra.mxu0 %v765
        %848 = vmatprep.subr.bf16.mxu0 0
        %849 = vmatpush1.bf16.msra.mxu0 %v764
        %850 = vmatprep.subr.bf16.mxu0 0
        %851 = vmatpush1.bf16.msra.mxu0 %v763
        %852 = vmatprep.subr.bf16.mxu0 0
        %853 = vmatpush2.bf16.msra.mxu0 0
        %854 = vmatprep.subr.bf16.mxu0 0
        %855 = vmatpush2.bf16.msra.mxu0 0
        %856 = vmatprep.subr.bf16.mxu0 0
        %857 = vmatpush2.bf16.msra.mxu0 0
        %858 = vmatprep.subr.bf16.mxu0 0
        %859 = vmatpush2.bf16.msra.mxu0 0
        %860 = vmatprep.subr.bf16.mxu0 0
        %861 = vmatpush2.bf16.msra.mxu0 0
        %862 = vmatprep.subr.bf16.mxu0 0
        %863 = vmatpush2.bf16.msra.mxu0 0
        %864 = vmatprep.subr.bf16.mxu0 0
        %865 = vmatpush2.bf16.msra.mxu0 0
        %866 = vmatprep.subr.bf16.mxu0 0
        %867 = vmatpush2.bf16.msra.mxu0 0
        %868 = vmatprep.mubr.bf16.mxu0 0
        %869 = vmatmul.mubr.bf16.gmra.mxu0 %v595
        %v870 = vpop.f32.mrf.mxu0
        %v871 = vadd.f32 %v830, %v870
        %v872 = vpop.f32.mrf.mxu0
        %v873 = vpop.f32.mrf.mxu0
        %v874 = vadd.f32 %v833, %v873
        %v875 = vpop.f32.mrf.mxu0
        %876 = vdwg.mxu0
        %v877 = vmax.f32 %v871, 0.0
        %v878 = vmax.f32 %v874, 0.0
        %v879 = vpack.c.bf16 %v878, %v877
        %v880 = vld [vmem:[#allocation10] sm:$0xf]
        %v881 = vld [vmem:[#allocation10 + $0x4] sm:$0xf]
        %v882 = vld [vmem:[#allocation10 + $0x8] sm:$0xf]
        %v883 = vld [vmem:[#allocation10 + $0xc] sm:$0xf]
        %v884 = vld [vmem:[#allocation10 + $0x10] sm:$0xf]
        %v885 = vld [vmem:[#allocation10 + $0x14] sm:$0xf]
        %v886 = vld [vmem:[#allocation10 + $0x18] sm:$0xf]
        %v887 = vld [vmem:[#allocation10 + $0x1c] sm:$0xf]
        %v888 = vld [vmem:[#allocation10 + $0x20] sm:$0xf]
        %v889 = vld [vmem:[#allocation10 + $0x24] sm:$0xf]
        %v890 = vld [vmem:[#allocation10 + $0x28] sm:$0xf]
        %v891 = vld [vmem:[#allocation10 + $0x2c] sm:$0xf]
        %v892 = vld [vmem:[#allocation10 + $0x30] sm:$0xf]
        %v893 = vld [vmem:[#allocation10 + $0x34] sm:$0xf]
        %v894 = vld [vmem:[#allocation10 + $0x38] sm:$0xf]
        %v895 = vld [vmem:[#allocation10 + $0x3c] sm:$0xf]
        %v896 = vld [vmem:[%s7] sm:$0x1]
        %v898 = vlaneseq
        %v899 = vshrl.u32 %v898, 7
        %v900 = vsub.s32 0, %v899
        %v901 = vrot.slane %v896, %v900
        %v919 = vunpack.c.l.b16 %v880
        %v920 = vunpack.c.l.b16 %v881
        %v921 = vunpack.c.l.b16 %v882
        %v922 = vunpack.c.l.b16 %v883
        %v923 = vunpack.c.l.b16 %v884
        %v924 = vunpack.c.l.b16 %v885
        %v925 = vunpack.c.l.b16 %v886
        %v926 = vunpack.c.l.b16 %v887
        %v927 = vunpack.c.l.b16 %v888
        %v928 = vunpack.c.l.b16 %v889
        %v929 = vunpack.c.l.b16 %v890
        %v930 = vunpack.c.l.b16 %v891
        %v931 = vunpack.c.l.b16 %v892
        %v932 = vunpack.c.l.b16 %v893
        %v933 = vunpack.c.l.b16 %v894
        %v934 = vunpack.c.l.b16 %v895
        %v935 = vpack.c.b16 %v920, %v919
        %v936 = vpack.c.b16 %v922, %v921
        %v937 = vpack.c.b16 %v924, %v923
        %v938 = vpack.c.b16 %v926, %v925
        %v939 = vpack.c.b16 %v928, %v927
        %v940 = vpack.c.b16 %v930, %v929
        %v941 = vpack.c.b16 %v932, %v931
        %v942 = vpack.c.b16 %v934, %v933
        %951 = vmatprep.subr.bf16.mxu0 0
        %952 = vmatpush1.bf16.msra.mxu0 %v942
        %953 = vmatprep.subr.bf16.mxu0 0
        %954 = vmatpush1.bf16.msra.mxu0 %v941
        %955 = vmatprep.subr.bf16.mxu0 0
        %956 = vmatpush1.bf16.msra.mxu0 %v940
        %957 = vmatprep.subr.bf16.mxu0 0
        %958 = vmatpush1.bf16.msra.mxu0 %v939
        %959 = vmatprep.subr.bf16.mxu0 0
        %960 = vmatpush1.bf16.msra.mxu0 %v938
        %961 = vmatprep.subr.bf16.mxu0 0
        %962 = vmatpush1.bf16.msra.mxu0 %v937
        %963 = vmatprep.subr.bf16.mxu0 0
        %964 = vmatpush1.bf16.msra.mxu0 %v936
        %965 = vmatprep.subr.bf16.mxu0 0
        %966 = vmatpush1.bf16.msra.mxu0 %v935
        %967 = vmatprep.subr.bf16.mxu0 0
        %968 = vmatpush2.bf16.msra.mxu0 0
        %969 = vmatprep.subr.bf16.mxu0 0
        %970 = vmatpush2.bf16.msra.mxu0 0
        %971 = vmatprep.subr.bf16.mxu0 0
        %972 = vmatpush2.bf16.msra.mxu0 0
        %973 = vmatprep.subr.bf16.mxu0 0
        %974 = vmatpush2.bf16.msra.mxu0 0
        %975 = vmatprep.subr.bf16.mxu0 0
        %976 = vmatpush2.bf16.msra.mxu0 0
        %977 = vmatprep.subr.bf16.mxu0 0
        %978 = vmatpush2.bf16.msra.mxu0 0
        %979 = vmatprep.subr.bf16.mxu0 0
        %980 = vmatpush2.bf16.msra.mxu0 0
        %981 = vmatprep.subr.bf16.mxu0 0
        %982 = vmatpush2.bf16.msra.mxu0 0
        %983 = vmatprep.mubr.bf16.mxu0 0
        %984 = vmatmul.mubr.bf16.gmra.mxu0 %v879
        %v985 = vpop.f32.mrf.mxu0
        %v986 = vadd.f32 %v901, %v985
        %v987 = vpop.f32.mrf.mxu0
        %v988 = vpop.f32.mrf.mxu0
        %v989 = vadd.f32 %v901, %v988
        %v990 = vpop.f32.mrf.mxu0
        %991 = vdwg.mxu0
        %v992 = vunpack.c.l.bf16 %v428
        %v993 = vunpack.c.l.bf16 %v429
        %v994 = vadd.f32 %v986, %v992
        %v995 = vadd.f32 %v989, %v993
        %v996 = vmax.f32 %v994, 0.0
        %v997 = vmax.f32 %v995, 0.0
        %v998 = vpack.c.bf16 %v997, %v996
        %v1000 = vunpack.c.l.b16 %v998
        %v1001 = vunpack.c.h.b16 %v998
        %v1002 = vpack.c.b16 %v1000, %v1000
        %v1003 = vpack.c.b16 %v1001, %v1001
        %1006 = vst [vmem:[%s424] sm:$0xf] %v1002
        %1007 = vst [vmem:[%s424 + $0x4] sm:$0xf] %v1003
        %s1008 = sand.u32 %s233, 1
        %s1009 = scalar_lea.sflag [#allocation4], %s1008
        %s1010 = sand.u32 %s233, 1
        %s1011 = smul.addr %s1010, 8
        %s1012 = scalar_lea.vmem [#allocation11], %s1011
        // Predicated region
        $region73: #{tpu_custom_call.1} parent=51 // pred_check
          %p1013 = pneg %p243
        $region74: #{tpu_custom_call.1} parent=51 // pred_check_branch
          %1015 = sbr.rel (%p1013) target = $region76
        $region75: #{tpu_custom_call.1} parent=51 // pred_region
          %s1016 = smul.u32 2, %s34
          %s1018 = ssub.s32 128, 128
          %1019 = vsyncadd %s1009, %s1018
          %s1020 = smul.addr %s33, 2
          %s1021 = sadd.s32 %s1016, %s1020
          %s1022 = smul.addr %s1021, 64
          %s1023 = scalar_lea.hbm %s8, %s1022
          %s1024 = sshll.u32 %s1012, 4
          %s1025 = int_to_ptr.vmem [resolvable:$true] %s1024
          %1030 = dma.vmem_to_hbm [thread:$0]  %s1025, 128, %s1023, %s1009, 64, 64, 4
        $region76: #{tpu_custom_call.1} parent=51 // pred_fallthru
          _
      $region52: #{tpu_custom_call.1} parent=5 // pred_fallthru
        _
      %p1031 = scmp.le.s32.totalorder 2, %s24
      // Predicated region
      $region77: #{tpu_custom_call.1} parent=5 // pred_check
        %p1032 = pneg %p1031
      $region78: #{tpu_custom_call.1} parent=5 // pred_check_branch
        %1034 = sbr.rel (%p1032) target = $region80
      $region79: #{tpu_custom_call.1} parent=5 // pred_region
        %s1035 = ssub.s32 %s24, 2
        // Predicated region
        $region81: #{tpu_custom_call.1} parent=79 // pred_check
          %p1036 = pneg %p249
        $region82: #{tpu_custom_call.1} parent=79 // pred_check_branch
          %1038 = sbr.rel (%p1036) target = $region84
        $region83: #{tpu_custom_call.1} parent=79 // pred_region
          %s1039 = sand.u32 %s234, 1
          %s1040 = scalar_lea.sflag [#allocation4], %s1039
          %s1041 = sand.u32 %s234, 1
          %s1042 = smul.addr %s1041, 8
          %s1043 = scalar_lea.vmem [#allocation11], %s1042
          %1044 = dma.done %s1040, 128
        $region84: #{tpu_custom_call.1} parent=79 // pred_fallthru
          _
      $region80: #{tpu_custom_call.1} parent=5 // pred_fallthru
        _
    $region6: #{tpu_custom_call.1} parent=1 // loop_footer
      %s28 = sadd.s32 1, %s24
    $region7: #{tpu_custom_call.1} parent=1 // loop_footer_branch
      %23 = sbr.rel target = $region3
    $region8: #{tpu_custom_call.1} parent=1 // loop_exit
      _
    %1045 = vsyncpa [#allocation3], 1
    %s1046 = scalar_lea.sflag [#allocation3], 1
    %1047 = vsyncpa %s1046, 1
    %1048 = vsyncpa [#allocation6], 1
    %s1049 = scalar_lea.sflag [#allocation6], 1
    %1050 = vsyncpa %s1049, 1
    %1051 = vsyncpa [#allocation9], 1
    %1052 = vsyncpa [#allocation4], 1
    %s1053 = scalar_lea.sflag [#allocation4], 1
    %1054 = vsyncpa %s1053, 1

</llo_original>
